<compile_context>
chip_gen: v5e
topology: v5e:2x2
jax: 0.10.0
libtpu: 0.0.40
codegen_flags: <defaults>
</compile_context>

<pallas_src>
import functools

import jax
import jax.numpy as jnp
from jax.experimental import pallas as pl
from jax.experimental.pallas import tpu as pltpu

EPS = 1e-5


# ----------------------------------------------------------------------------
# Fused residual-attention-block kernel (one grid step = (batch tile, layer))
# ----------------------------------------------------------------------------
def residual_stack_kernel(
    x_ref,
    ln1w_ref, ln1b_ref, inw_ref, inb_ref, outw_ref, outb_ref,
    ln2w_ref, ln2b_ref, fcw_ref, fcb_ref, pjw_ref, pjb_ref,
    y_ref,
    attn_ref,
    *, n_head, nb,
):
    layer = pl.program_id(1)
    NB, L, E = y_ref.shape
    R = NB * L
    d_head = E // n_head
    scale = float(d_head) ** -0.5

    # Running activation lives in the (resident) output block across the layer axis.
    @pl.when(layer == 0)
    def _():
        y_ref[...] = x_ref[...].astype(jnp.float32)

    x = y_ref[...].reshape(R, E)                               # (NB*L, E) fp32

    # ------------------ LN1 (fp32 stats) + fused QKV projection -------------
    mu = jnp.mean(x, axis=-1, keepdims=True)
    var = jnp.mean((x - mu) ** 2, axis=-1, keepdims=True)
    h = (x - mu) * jax.lax.rsqrt(var + EPS)
    h = h * ln1w_ref[...] + ln1b_ref[...]

    qkv = jnp.dot(h.astype(jnp.bfloat16), inw_ref[...],
                  preferred_element_type=jnp.float32) + inb_ref[...]   # (R, 3E)

    q = qkv[:, :E] * scale          # scale folded into q (cheaper than (L,L) mul)
    k = qkv[:, E:2 * E]
    v = qkv[:, 2 * E:]

    # ------------------ per-(batch, head) attention, all in VMEM ------------
    # Output is accumulated directly into a VMEM scratch (no concat / long
    # live ranges).  Softmax normalization is an exact divide.
    # TODO(synk): for long sequences, switch to a flash-style (tq, tk) tiling
    #             with online softmax; for d_head < 128 at real widths, process
    #             heads in lane-aligned groups of 128 // d_head.
    for b in range(nb):
        rs = slice(b * L, (b + 1) * L)
        for hh in range(n_head):
            cs = slice(hh * d_head, (hh + 1) * d_head)
            qh = q[rs, cs].astype(jnp.bfloat16)
            kh = k[rs, cs].astype(jnp.bfloat16)
            vh = v[rs, cs].astype(jnp.bfloat16)
            s = jnp.einsum("qd,kd->qk", qh, kh,
                           preferred_element_type=jnp.float32)
            s = s - jnp.max(s, axis=-1, keepdims=True)
            p = jnp.exp(s)
            p = p / jnp.sum(p, axis=-1, keepdims=True)
            attn_ref[rs, cs] = jnp.dot(p.astype(jnp.bfloat16), vh,
                                       preferred_element_type=jnp.float32)

    a_out = jnp.dot(attn_ref[...].astype(jnp.bfloat16), outw_ref[...],
                    preferred_element_type=jnp.float32) + outb_ref[...]
    x = x + a_out                                              # x = x + attn(ln_1(x))

    # ------------------ LN2 + MLP (QuickGELU) -------------------------------
    mu2 = jnp.mean(x, axis=-1, keepdims=True)
    var2 = jnp.mean((x - mu2) ** 2, axis=-1, keepdims=True)
    h2 = (x - mu2) * jax.lax.rsqrt(var2 + EPS)
    h2 = h2 * ln2w_ref[...] + ln2b_ref[...]

    f = jnp.dot(h2.astype(jnp.bfloat16), fcw_ref[...],
                preferred_element_type=jnp.float32) + fcb_ref[...]
    g = f * jax.nn.sigmoid(1.702 * f)                          # QuickGELU
    m = jnp.dot(g.astype(jnp.bfloat16), pjw_ref[...],
                preferred_element_type=jnp.float32) + pjb_ref[...]

    y_ref[...] = (x + m).reshape(NB, L, E)                     # x = x + mlp(ln_2(x))


# ----------------------------------------------------------------------------
# Generation-aware knobs
# ----------------------------------------------------------------------------
def _vmem_capacity_bytes():
    try:
        return int(pltpu.get_tpu_info().vmem_capacity_bytes)
    except Exception:
        try:
            kind = jax.devices()[0].device_kind.lower()
            if "v5" in kind or "v6" in kind:
                return 128 * 1024 * 1024
        except Exception:
            pass
        return 64 * 1024 * 1024        # conservative (v7x per-TC)


def _pick_batch_tile(N, L):
    """Largest NB dividing N with NB*L <= target rows per weight fetch."""
    try:
        kind = jax.devices()[0].device_kind.lower()
        target = 128 if ("v5 lite" in kind or "v5e" in kind) else 256
    except Exception:
        target = 256
    nb = max(1, min(N, max(1, target // max(L, 1))))
    while N % nb:
        nb -= 1
    return nb


def _vmem_budget_bytes(L, E, n_head, nb):
    R = nb * L
    # Double-buffered bf16 weight slabs (12*E^2 per layer) + fp32 bias vectors.
    weights = 2 * (2 * 12 * E * E + 4 * 16 * E)
    # Resident in/out activation blocks (fp32, double-buffered).
    acts = 2 * 2 * 4 * R * E
    # In-kernel temporaries: qkv, mlp hidden, attn scratch, scores (fp32).
    temps = 4 * (R * 3 * E + R * 4 * E + 2 * R * E + n_head * L * L)
    est = weights + acts + temps + (4 << 20)      # slack for compiler scratch
    ceiling = int(_vmem_capacity_bytes() * 0.8)   # ~51 MiB v7x, ~102 MiB v5e/v6e
    # TODO(synk): if `est` exceeds `ceiling` at very large E on v7x, K-tile the
    #             MLP weights (pl.Buffered(1) or an inner pltpu.emit_pipeline).
    return max(32 * 1024 * 1024, min(ceiling, est))


# ----------------------------------------------------------------------------
# Transformer forward (single fused pallas_call over all layers)
# ----------------------------------------------------------------------------
def transformer_pallas(x, params, n_head):
    """x: (L, N, E) seq-first, params: dict of (LAYERS, ...) stacked arrays."""
    L, N, E = x.shape
    layers = params["in_w"].shape[0]
    nb = _pick_batch_tile(N, L)

    # TODO(synk): for real CLIP configs pad L to a multiple of 8 and E to a
    #             multiple of 128 (mask padded keys pre-softmax) for lane-dense
    #             unmasked vld/vst.
    x_nle = jnp.transpose(x, (1, 0, 2)).astype(jnp.float32)    # (N, L, E)

    act_spec = pl.BlockSpec((nb, L, E), lambda n, l: (n, 0, 0))

    def layer_spec(arr):
        # Select layer l, keep full trailing dims (satisfies (8,128)/full-dim rule).
        return pl.BlockSpec((None,) + arr.shape[1:], lambda n, l: (l, 0, 0))

    names = ["ln1_w", "ln1_b", "in_w", "in_b", "out_w", "out_b",
             "ln2_w", "ln2_b", "fc_w", "fc_b", "pj_w", "pj_b"]
    weight_args = [params[nm] for nm in names]

    kernel = functools.partial(residual_stack_kernel, n_head=n_head, nb=nb)

    y = pl.pallas_call(
        kernel,
        out_shape=jax.ShapeDtypeStruct((N, L, E), jnp.float32),
        grid_spec=pltpu.PrefetchScalarGridSpec(
            num_scalar_prefetch=0,
            grid=(N // nb, layers),
            in_specs=[act_spec] + [layer_spec(a) for a in weight_args],
            out_specs=act_spec,
            scratch_shapes=[pltpu.VMEM((nb * L, E), jnp.float32)],
        ),
        compiler_params=pltpu.CompilerParams(
            # TODO(synk): on v7x consider pltpu.CORE_PARALLEL on the batch-tile
            #             axis once N//nb >= 2, to shard across the two TCs.
            dimension_semantics=("parallel", "arbitrary"),
            vmem_limit_bytes=_vmem_budget_bytes(L, E, n_head, nb),
        ),
    )(x_nle, *weight_args)

    return jnp.transpose(y, (1, 0, 2)).astype(x.dtype)


# ----------------------------------------------------------------------------
# Pure-JAX reference (fp32 math on the same stored weight values)
# ----------------------------------------------------------------------------
def transformer_ref(x, params, n_head):
    L, N, E = x.shape
    Dh = E // n_head
    layers = params["in_w"].shape[0]

    def ln(t, w, b):
        m = t.mean(-1, keepdims=True)
        v = ((t - m) ** 2).mean(-1, keepdims=True)
        return (t - m) / jnp.sqrt(v + EPS) * w + b

    for i in range(layers):
        g32 = lambda name: params[name][i].astype(jnp.float32)  # noqa: E731

        h = ln(x, g32("ln1_w")[0], g32("ln1_b")[0]).reshape(L * N, E)
        qkv = h @ g32("in_w") + g32("in_b")[0]

        def split(t):
            return t.reshape(L, N, n_head, Dh).transpose(1, 2, 0, 3)

        q, k, v = (split(qkv[:, j * E:(j + 1) * E]) for j in range(3))
        s = jnp.einsum("nhqd,nhkd->nhqk", q, k) * (float(Dh) ** -0.5)
        a = jax.nn.softmax(s, axis=-1)
        o = jnp.einsum("nhqk,nhkd->nhqd", a, v).transpose(2, 0, 1, 3).reshape(L * N, E)
        o = o @ g32("out_w") + g32("out_b")[0]
        x = x + o.reshape(L, N, E)

        h2 = ln(x, g32("ln2_w")[0], g32("ln2_b")[0]).reshape(L * N, E)
        f = h2 @ g32("fc_w") + g32("fc_b")[0]
        gg = f * jax.nn.sigmoid(1.702 * f)
        m = gg @ g32("pj_w") + g32("pj_b")[0]
        x = x + m.reshape(L, N, E)
    return x


# ----------------------------------------------------------------------------
# Deterministic synthetic params, stacked along a leading LAYERS axis.
# Matrices pre-transposed to (in, out); big matmul weights stored bf16.
# ----------------------------------------------------------------------------
def init_params(key, width, layers):
    E = width
    f32, bf16 = jnp.float32, jnp.bfloat16
    s = 0.02
    ks = jax.random.split(key, 8)

    def rnd(k, shape, dtype):
        return (jax.random.normal(k, shape, dtype=jnp.float32) * s).astype(dtype)

    return {
        "ln1_w": jnp.ones((layers, 1, E), f32),
        "ln1_b": jnp.zeros((layers, 1, E), f32),
        "in_w": rnd(ks[0], (layers, E, 3 * E), bf16),
        "in_b": rnd(ks[1], (layers, 1, 3 * E), f32),
        "out_w": rnd(ks[2], (layers, E, E), bf16),
        "out_b": rnd(ks[3], (layers, 1, E), f32),
        "ln2_w": jnp.ones((layers, 1, E), f32),
        "ln2_b": jnp.zeros((layers, 1, E), f32),
        "fc_w": rnd(ks[4], (layers, E, 4 * E), bf16),
        "fc_b": rnd(ks[5], (layers, 1, 4 * E), f32),
        "pj_w": rnd(ks[6], (layers, 4 * E, E), bf16),
        "pj_b": rnd(ks[7], (layers, 1, E), f32),
    }


if __name__ == "__main__":
    # Transformer(width=32, layers=2, heads=4), input (seq=8, batch=2, width=32)
    WIDTH, LAYERS, HEADS = 32, 2, 4
    L, N = 8, 2

    root = jax.random.PRNGKey(0)
    kx, kp = jax.random.split(root)
    params = init_params(kp, WIDTH, LAYERS)
    x = jax.random.normal(kx, (L, N, WIDTH), dtype=jnp.float32)

    out = transformer_pallas(x, params, HEADS)
    out = jax.block_until_ready(out)
    assert out.shape == (L, N, WIDTH)

    ref = transformer_ref(x, params, HEADS)
    err = float(jnp.max(jnp.abs(out - ref)))
    # bf16 MXU operands (fp32 accumulation) -> loosened tolerance.
    assert err < 2e-2, err
    print("KERNEL_OK")
</pallas_src>

<mosaic_0001>
module attributes {stable_mosaic.version = 11 : i64} {
  func.func @residual_stack_kernel(%arg0: i32, %arg1: i32, %arg2: memref<2x8x32xf32, #tpu.memory_space<vmem>>, %arg3: memref<1x1x32xf32, #tpu.memory_space<vmem>>, %arg4: memref<1x1x32xf32, #tpu.memory_space<vmem>>, %arg5: memref<1x32x96xbf16, #tpu.memory_space<vmem>>, %arg6: memref<1x1x96xf32, #tpu.memory_space<vmem>>, %arg7: memref<1x32x32xbf16, #tpu.memory_space<vmem>>, %arg8: memref<1x1x32xf32, #tpu.memory_space<vmem>>, %arg9: memref<1x1x32xf32, #tpu.memory_space<vmem>>, %arg10: memref<1x1x32xf32, #tpu.memory_space<vmem>>, %arg11: memref<1x32x128xbf16, #tpu.memory_space<vmem>>, %arg12: memref<1x1x128xf32, #tpu.memory_space<vmem>>, %arg13: memref<1x128x32xbf16, #tpu.memory_space<vmem>>, %arg14: memref<1x1x32xf32, #tpu.memory_space<vmem>>, %arg15: memref<2x8x32xf32, #tpu.memory_space<vmem>>, %arg16: memref<16x32xf32, #tpu.memory_space<vmem>>) attributes {dimension_semantics = [#tpu.dimension_semantics<parallel>, #tpu.dimension_semantics<arbitrary>], iteration_bounds = array<i64: 1, 2>, scalar_prefetch = 0 : i64, scratch_operands = 1 : i64, tpu.core_type = #tpu.core_type<tc>, window_params = [{transform_indices = @transform_0, window_bounds = array<i64: 2, 8, 32>}, {transform_indices = @transform_1, window_bounds = array<i64: 1, 1, 32>}, {transform_indices = @transform_2, window_bounds = array<i64: 1, 1, 32>}, {transform_indices = @transform_3, window_bounds = array<i64: 1, 32, 96>}, {transform_indices = @transform_4, window_bounds = array<i64: 1, 1, 96>}, {transform_indices = @transform_5, window_bounds = array<i64: 1, 32, 32>}, {transform_indices = @transform_6, window_bounds = array<i64: 1, 1, 32>}, {transform_indices = @transform_7, window_bounds = array<i64: 1, 1, 32>}, {transform_indices = @transform_8, window_bounds = array<i64: 1, 1, 32>}, {transform_indices = @transform_9, window_bounds = array<i64: 1, 32, 128>}, {transform_indices = @transform_10, window_bounds = array<i64: 1, 1, 128>}, {transform_indices = @transform_11, window_bounds = array<i64: 1, 128, 32>}, {transform_indices = @transform_12, window_bounds = array<i64: 1, 1, 32>}, {transform_indices = @transform_13, window_bounds = array<i64: 2, 8, 32>}]} {
    %c0_i32 = arith.constant 0 : i32
    %0 = arith.cmpi eq, %arg1, %c0_i32 : i32
    %1 = arith.extui %0 : i1 to i32
    %c0_i32_0 = arith.constant 0 : i32
    %2 = arith.cmpi ne, %1, %c0_i32_0 : i32
    scf.if %2 {
      %c0_105 = arith.constant 0 : index
      %c0_106 = arith.constant 0 : index
      %c0_107 = arith.constant 0 : index
      %259 = vector.load %arg2[%c0_105, %c0_106, %c0_107] : memref<2x8x32xf32, #tpu.memory_space<vmem>>, vector<2x8x32xf32>
      %c0_108 = arith.constant 0 : index
      %c0_109 = arith.constant 0 : index
      %c0_110 = arith.constant 0 : index
      %260 = vector.load %arg15[%c0_108, %c0_109, %c0_110] : memref<2x8x32xf32, #tpu.memory_space<vmem>>, vector<2x8x32xf32>
      tpu.vector_store %arg15[%c0_108, %c0_109, %c0_110], %259 {strides = array<i32>} : memref<2x8x32xf32, #tpu.memory_space<vmem>>, vector<2x8x32xf32>,
    } else {
    }
    %c0 = arith.constant 0 : index
    %c0_1 = arith.constant 0 : index
    %c0_2 = arith.constant 0 : index
    %3 = vector.load %arg15[%c0, %c0_1, %c0_2] : memref<2x8x32xf32, #tpu.memory_space<vmem>>, vector<2x8x32xf32>
    %4 = vector.shape_cast %3 : vector<2x8x32xf32> to vector<16x32xf32>
    %cst = arith.constant dense<0.000000e+00> : vector<16xf32>
    %5 = vector.multi_reduction <add>, %4, %cst [1] : vector<16x32xf32> to vector<16xf32>
    %6 = vector.shape_cast %5 : vector<16xf32> to vector<16x1xf32>
    %cst_3 = arith.constant 3.200000e+01 : f32
    %7 = vector.broadcast %cst_3 : f32 to vector<16x1xf32>
    %8 = arith.divf %6, %7 : vector<16x1xf32>
    %9 = vector.broadcast %8 : vector<16x1xf32> to vector<16x32xf32>
    %10 = arith.subf %4, %9 : vector<16x32xf32>
    %11 = arith.mulf %10, %10 : vector<16x32xf32>
    %cst_4 = arith.constant dense<0.000000e+00> : vector<16xf32>
    %12 = vector.multi_reduction <add>, %11, %cst_4 [1] : vector<16x32xf32> to vector<16xf32>
    %13 = vector.shape_cast %12 : vector<16xf32> to vector<16x1xf32>
    %cst_5 = arith.constant 3.200000e+01 : f32
    %14 = vector.broadcast %cst_5 : f32 to vector<16x1xf32>
    %15 = arith.divf %13, %14 : vector<16x1xf32>
    %16 = vector.broadcast %8 : vector<16x1xf32> to vector<16x32xf32>
    %17 = arith.subf %4, %16 : vector<16x32xf32>
    %cst_6 = arith.constant 9.99999974E-6 : f32
    %18 = vector.broadcast %cst_6 : f32 to vector<16x1xf32>
    %19 = arith.addf %15, %18 : vector<16x1xf32>
    %20 = math.rsqrt %19 : vector<16x1xf32>
    %21 = vector.broadcast %20 : vector<16x1xf32> to vector<16x32xf32>
    %22 = arith.mulf %17, %21 : vector<16x32xf32>
    %c0_7 = arith.constant 0 : index
    %c0_8 = arith.constant 0 : index
    %c0_9 = arith.constant 0 : index
    %23 = vector.load %arg3[%c0_7, %c0_8, %c0_9] : memref<1x1x32xf32, #tpu.memory_space<vmem>>, vector<1x1x32xf32>
    %24 = vector.shape_cast %23 : vector<1x1x32xf32> to vector<1x32xf32>
    %25 = vector.broadcast %24 : vector<1x32xf32> to vector<16x32xf32>
    %26 = arith.mulf %22, %25 : vector<16x32xf32>
    %c0_10 = arith.constant 0 : index
    %c0_11 = arith.constant 0 : index
    %c0_12 = arith.constant 0 : index
    %27 = vector.load %arg4[%c0_10, %c0_11, %c0_12] : memref<1x1x32xf32, #tpu.memory_space<vmem>>, vector<1x1x32xf32>
    %28 = vector.shape_cast %27 : vector<1x1x32xf32> to vector<1x32xf32>
    %29 = vector.broadcast %28 : vector<1x32xf32> to vector<16x32xf32>
    %30 = arith.addf %26, %29 : vector<16x32xf32>
    %31 = arith.truncf %30 : vector<16x32xf32> to vector<16x32xbf16>
    %c0_13 = arith.constant 0 : index
    %c0_14 = arith.constant 0 : index
    %c0_15 = arith.constant 0 : index
    %32 = vector.load %arg5[%c0_13, %c0_14, %c0_15] : memref<1x32x96xbf16, #tpu.memory_space<vmem>>, vector<1x32x96xbf16>
    %33 = vector.shape_cast %32 : vector<1x32x96xbf16> to vector<32x96xbf16>
    %cst_16 = arith.constant dense<0.000000e+00> : vector<16x96xf32>
    %34 = tpu.matmul %31, %33, %cst_16 {dimension_numbers = #tpu.dot_dimension_numbers<[1], [0], [0], [1], [0, 0, 1, 1], [], []>} : vector<16x32xbf16>, vector<32x96xbf16>, vector<16x96xf32> -> vector<16x96xf32>
    %c0_17 = arith.constant 0 : index
    %c0_18 = arith.constant 0 : index
    %c0_19 = arith.constant 0 : index
    %35 = vector.load %arg6[%c0_17, %c0_18, %c0_19] : memref<1x1x96xf32, #tpu.memory_space<vmem>>, vector<1x1x96xf32>
    %36 = vector.shape_cast %35 : vector<1x1x96xf32> to vector<1x96xf32>
    %37 = vector.broadcast %36 : vector<1x96xf32> to vector<16x96xf32>
    %38 = arith.addf %34, %37 : vector<16x96xf32>
    %39 = vector.extract_strided_slice %38 {offsets = [0, 0], sizes = [16, 32], strides = [1, 1]} : vector<16x96xf32> to vector<16x32xf32>
    %cst_20 = arith.constant 0.353553385 : f32
    %40 = vector.broadcast %cst_20 : f32 to vector<16x32xf32>
    %41 = arith.mulf %39, %40 : vector<16x32xf32>
    %42 = vector.extract_strided_slice %38 {offsets = [0, 32], sizes = [16, 32], strides = [1, 1]} : vector<16x96xf32> to vector<16x32xf32>
    %43 = vector.extract_strided_slice %38 {offsets = [0, 64], sizes = [16, 32], strides = [1, 1]} : vector<16x96xf32> to vector<16x32xf32>
    %44 = vector.extract_strided_slice %41 {offsets = [0, 0], sizes = [8, 8], strides = [1, 1]} : vector<16x32xf32> to vector<8x8xf32>
    %45 = arith.truncf %44 : vector<8x8xf32> to vector<8x8xbf16>
    %46 = vector.extract_strided_slice %42 {offsets = [0, 0], sizes = [8, 8], strides = [1, 1]} : vector<16x32xf32> to vector<8x8xf32>
    %47 = arith.truncf %46 : vector<8x8xf32> to vector<8x8xbf16>
    %48 = vector.extract_strided_slice %43 {offsets = [0, 0], sizes = [8, 8], strides = [1, 1]} : vector<16x32xf32> to vector<8x8xf32>
    %49 = arith.truncf %48 : vector<8x8xf32> to vector<8x8xbf16>
    "tpu.trace_start"() <{level = 10 : i32, message = "qd,kd->qk"}> : () -> ()
    %cst_21 = arith.constant dense<0.000000e+00> : vector<8x8xf32>
    %50 = tpu.matmul %45, %47, %cst_21 {dimension_numbers = #tpu.dot_dimension_numbers<[1], [1], [0], [0], [0, 0, 1, 0], [], []>} : vector<8x8xbf16>, vector<8x8xbf16>, vector<8x8xf32> -> vector<8x8xf32>
    "tpu.trace_stop"() : () -> ()
    %cst_22 = arith.constant dense<0xFF800000> : vector<8xf32>
    %51 = vector.multi_reduction <maximumf>, %50, %cst_22 [1] : vector<8x8xf32> to vector<8xf32>
    %52 = vector.shape_cast %51 : vector<8xf32> to vector<8x1xf32>
    %53 = vector.broadcast %52 : vector<8x1xf32> to vector<8x8xf32>
    %54 = arith.subf %50, %53 : vector<8x8xf32>
    %55 = math.exp %54 : vector<8x8xf32>
    %cst_23 = arith.constant dense<0.000000e+00> : vector<8xf32>
    %56 = vector.multi_reduction <add>, %55, %cst_23 [1] : vector<8x8xf32> to vector<8xf32>
    %57 = vector.shape_cast %56 : vector<8xf32> to vector<8x1xf32>
    %58 = vector.broadcast %57 : vector<8x1xf32> to vector<8x8xf32>
    %59 = arith.divf %55, %58 : vector<8x8xf32>
    %60 = arith.truncf %59 : vector<8x8xf32> to vector<8x8xbf16>
    %cst_24 = arith.constant dense<0.000000e+00> : vector<8x8xf32>
    %61 = tpu.matmul %60, %49, %cst_24 {dimension_numbers = #tpu.dot_dimension_numbers<[1], [0], [0], [1], [0, 0, 1, 1], [], []>} : vector<8x8xbf16>, vector<8x8xbf16>, vector<8x8xf32> -> vector<8x8xf32>
    %c0_25 = arith.constant 0 : index
    %c0_26 = arith.constant 0 : index
    %62 = vector.load %arg16[%c0_25, %c0_26] : memref<16x32xf32, #tpu.memory_space<vmem>>, vector<8x8xf32>
    tpu.vector_store %arg16[%c0_25, %c0_26], %61 {strides = array<i32>} : memref<16x32xf32, #tpu.memory_space<vmem>>, vector<8x8xf32>,
    %63 = vector.extract_strided_slice %41 {offsets = [0, 8], sizes = [8, 8], strides = [1, 1]} : vector<16x32xf32> to vector<8x8xf32>
    %64 = arith.truncf %63 : vector<8x8xf32> to vector<8x8xbf16>
    %65 = vector.extract_strided_slice %42 {offsets = [0, 8], sizes = [8, 8], strides = [1, 1]} : vector<16x32xf32> to vector<8x8xf32>
    %66 = arith.truncf %65 : vector<8x8xf32> to vector<8x8xbf16>
    %67 = vector.extract_strided_slice %43 {offsets = [0, 8], sizes = [8, 8], strides = [1, 1]} : vector<16x32xf32> to vector<8x8xf32>
    %68 = arith.truncf %67 : vector<8x8xf32> to vector<8x8xbf16>
    "tpu.trace_start"() <{level = 10 : i32, message = "qd,kd->qk"}> : () -> ()
    %cst_27 = arith.constant dense<0.000000e+00> : vector<8x8xf32>
    %69 = tpu.matmul %64, %66, %cst_27 {dimension_numbers = #tpu.dot_dimension_numbers<[1], [1], [0], [0], [0, 0, 1, 0], [], []>} : vector<8x8xbf16>, vector<8x8xbf16>, vector<8x8xf32> -> vector<8x8xf32>
    "tpu.trace_stop"() : () -> ()
    %cst_28 = arith.constant dense<0xFF800000> : vector<8xf32>
    %70 = vector.multi_reduction <maximumf>, %69, %cst_28 [1] : vector<8x8xf32> to vector<8xf32>
    %71 = vector.shape_cast %70 : vector<8xf32> to vector<8x1xf32>
    %72 = vector.broadcast %71 : vector<8x1xf32> to vector<8x8xf32>
    %73 = arith.subf %69, %72 : vector<8x8xf32>
    %74 = math.exp %73 : vector<8x8xf32>
    %cst_29 = arith.constant dense<0.000000e+00> : vector<8xf32>
    %75 = vector.multi_reduction <add>, %74, %cst_29 [1] : vector<8x8xf32> to vector<8xf32>
    %76 = vector.shape_cast %75 : vector<8xf32> to vector<8x1xf32>
    %77 = vector.broadcast %76 : vector<8x1xf32> to vector<8x8xf32>
    %78 = arith.divf %74, %77 : vector<8x8xf32>
    %79 = arith.truncf %78 : vector<8x8xf32> to vector<8x8xbf16>
    %cst_30 = arith.constant dense<0.000000e+00> : vector<8x8xf32>
    %80 = tpu.matmul %79, %68, %cst_30 {dimension_numbers = #tpu.dot_dimension_numbers<[1], [0], [0], [1], [0, 0, 1, 1], [], []>} : vector<8x8xbf16>, vector<8x8xbf16>, vector<8x8xf32> -> vector<8x8xf32>
    %c0_31 = arith.constant 0 : index
    %c8 = arith.constant 8 : index
    %81 = vector.load %arg16[%c0_31, %c8] : memref<16x32xf32, #tpu.memory_space<vmem>>, vector<8x8xf32>
    tpu.vector_store %arg16[%c0_31, %c8], %80 {strides = array<i32>} : memref<16x32xf32, #tpu.memory_space<vmem>>, vector<8x8xf32>,
    %82 = vector.extract_strided_slice %41 {offsets = [0, 16], sizes = [8, 8], strides = [1, 1]} : vector<16x32xf32> to vector<8x8xf32>
    %83 = arith.truncf %82 : vector<8x8xf32> to vector<8x8xbf16>
    %84 = vector.extract_strided_slice %42 {offsets = [0, 16], sizes = [8, 8], strides = [1, 1]} : vector<16x32xf32> to vector<8x8xf32>
    %85 = arith.truncf %84 : vector<8x8xf32> to vector<8x8xbf16>
    %86 = vector.extract_strided_slice %43 {offsets = [0, 16], sizes = [8, 8], strides = [1, 1]} : vector<16x32xf32> to vector<8x8xf32>
    %87 = arith.truncf %86 : vector<8x8xf32> to vector<8x8xbf16>
    "tpu.trace_start"() <{level = 10 : i32, message = "qd,kd->qk"}> : () -> ()
    %cst_32 = arith.constant dense<0.000000e+00> : vector<8x8xf32>
    %88 = tpu.matmul %83, %85, %cst_32 {dimension_numbers = #tpu.dot_dimension_numbers<[1], [1], [0], [0], [0, 0, 1, 0], [], []>} : vector<8x8xbf16>, vector<8x8xbf16>, vector<8x8xf32> -> vector<8x8xf32>
    "tpu.trace_stop"() : () -> ()
    %cst_33 = arith.constant dense<0xFF800000> : vector<8xf32>
    %89 = vector.multi_reduction <maximumf>, %88, %cst_33 [1] : vector<8x8xf32> to vector<8xf32>
    %90 = vector.shape_cast %89 : vector<8xf32> to vector<8x1xf32>
    %91 = vector.broadcast %90 : vector<8x1xf32> to vector<8x8xf32>
    %92 = arith.subf %88, %91 : vector<8x8xf32>
    %93 = math.exp %92 : vector<8x8xf32>
    %cst_34 = arith.constant dense<0.000000e+00> : vector<8xf32>
    %94 = vector.multi_reduction <add>, %93, %cst_34 [1] : vector<8x8xf32> to vector<8xf32>
    %95 = vector.shape_cast %94 : vector<8xf32> to vector<8x1xf32>
    %96 = vector.broadcast %95 : vector<8x1xf32> to vector<8x8xf32>
    %97 = arith.divf %93, %96 : vector<8x8xf32>
    %98 = arith.truncf %97 : vector<8x8xf32> to vector<8x8xbf16>
    %cst_35 = arith.constant dense<0.000000e+00> : vector<8x8xf32>
    %99 = tpu.matmul %98, %87, %cst_35 {dimension_numbers = #tpu.dot_dimension_numbers<[1], [0], [0], [1], [0, 0, 1, 1], [], []>} : vector<8x8xbf16>, vector<8x8xbf16>, vector<8x8xf32> -> vector<8x8xf32>
    %c0_36 = arith.constant 0 : index
    %c16 = arith.constant 16 : index
    %100 = vector.load %arg16[%c0_36, %c16] : memref<16x32xf32, #tpu.memory_space<vmem>>, vector<8x8xf32>
    tpu.vector_store %arg16[%c0_36, %c16], %99 {strides = array<i32>} : memref<16x32xf32, #tpu.memory_space<vmem>>, vector<8x8xf32>,
    %101 = vector.extract_strided_slice %41 {offsets = [0, 24], sizes = [8, 8], strides = [1, 1]} : vector<16x32xf32> to vector<8x8xf32>
    %102 = arith.truncf %101 : vector<8x8xf32> to vector<8x8xbf16>
    %103 = vector.extract_strided_slice %42 {offsets = [0, 24], sizes = [8, 8], strides = [1, 1]} : vector<16x32xf32> to vector<8x8xf32>
    %104 = arith.truncf %103 : vector<8x8xf32> to vector<8x8xbf16>
    %105 = vector.extract_strided_slice %43 {offsets = [0, 24], sizes = [8, 8], strides = [1, 1]} : vector<16x32xf32> to vector<8x8xf32>
    %106 = arith.truncf %105 : vector<8x8xf32> to vector<8x8xbf16>
    "tpu.trace_start"() <{level = 10 : i32, message = "qd,kd->qk"}> : () -> ()
    %cst_37 = arith.constant dense<0.000000e+00> : vector<8x8xf32>
    %107 = tpu.matmul %102, %104, %cst_37 {dimension_numbers = #tpu.dot_dimension_numbers<[1], [1], [0], [0], [0, 0, 1, 0], [], []>} : vector<8x8xbf16>, vector<8x8xbf16>, vector<8x8xf32> -> vector<8x8xf32>
    "tpu.trace_stop"() : () -> ()
    %cst_38 = arith.constant dense<0xFF800000> : vector<8xf32>
    %108 = vector.multi_reduction <maximumf>, %107, %cst_38 [1] : vector<8x8xf32> to vector<8xf32>
    %109 = vector.shape_cast %108 : vector<8xf32> to vector<8x1xf32>
    %110 = vector.broadcast %109 : vector<8x1xf32> to vector<8x8xf32>
    %111 = arith.subf %107, %110 : vector<8x8xf32>
    %112 = math.exp %111 : vector<8x8xf32>
    %cst_39 = arith.constant dense<0.000000e+00> : vector<8xf32>
    %113 = vector.multi_reduction <add>, %112, %cst_39 [1] : vector<8x8xf32> to vector<8xf32>
    %114 = vector.shape_cast %113 : vector<8xf32> to vector<8x1xf32>
    %115 = vector.broadcast %114 : vector<8x1xf32> to vector<8x8xf32>
    %116 = arith.divf %112, %115 : vector<8x8xf32>
    %117 = arith.truncf %116 : vector<8x8xf32> to vector<8x8xbf16>
    %cst_40 = arith.constant dense<0.000000e+00> : vector<8x8xf32>
    %118 = tpu.matmul %117, %106, %cst_40 {dimension_numbers = #tpu.dot_dimension_numbers<[1], [0], [0], [1], [0, 0, 1, 1], [], []>} : vector<8x8xbf16>, vector<8x8xbf16>, vector<8x8xf32> -> vector<8x8xf32>
    %c0_41 = arith.constant 0 : index
    %c24 = arith.constant 24 : index
    %119 = vector.load %arg16[%c0_41, %c24] : memref<16x32xf32, #tpu.memory_space<vmem>>, vector<8x8xf32>
    tpu.vector_store %arg16[%c0_41, %c24], %118 {strides = array<i32>} : memref<16x32xf32, #tpu.memory_space<vmem>>, vector<8x8xf32>,
    %120 = vector.extract_strided_slice %41 {offsets = [8, 0], sizes = [8, 8], strides = [1, 1]} : vector<16x32xf32> to vector<8x8xf32>
    %121 = arith.truncf %120 : vector<8x8xf32> to vector<8x8xbf16>
    %122 = vector.extract_strided_slice %42 {offsets = [8, 0], sizes = [8, 8], strides = [1, 1]} : vector<16x32xf32> to vector<8x8xf32>
    %123 = arith.truncf %122 : vector<8x8xf32> to vector<8x8xbf16>
    %124 = vector.extract_strided_slice %43 {offsets = [8, 0], sizes = [8, 8], strides = [1, 1]} : vector<16x32xf32> to vector<8x8xf32>
    %125 = arith.truncf %124 : vector<8x8xf32> to vector<8x8xbf16>
    "tpu.trace_start"() <{level = 10 : i32, message = "qd,kd->qk"}> : () -> ()
    %cst_42 = arith.constant dense<0.000000e+00> : vector<8x8xf32>
    %126 = tpu.matmul %121, %123, %cst_42 {dimension_numbers = #tpu.dot_dimension_numbers<[1], [1], [0], [0], [0, 0, 1, 0], [], []>} : vector<8x8xbf16>, vector<8x8xbf16>, vector<8x8xf32> -> vector<8x8xf32>
    "tpu.trace_stop"() : () -> ()
    %cst_43 = arith.constant dense<0xFF800000> : vector<8xf32>
    %127 = vector.multi_reduction <maximumf>, %126, %cst_43 [1] : vector<8x8xf32> to vector<8xf32>
    %128 = vector.shape_cast %127 : vector<8xf32> to vector<8x1xf32>
    %129 = vector.broadcast %128 : vector<8x1xf32> to vector<8x8xf32>
    %130 = arith.subf %126, %129 : vector<8x8xf32>
    %131 = math.exp %130 : vector<8x8xf32>
    %cst_44 = arith.constant dense<0.000000e+00> : vector<8xf32>
    %132 = vector.multi_reduction <add>, %131, %cst_44 [1] : vector<8x8xf32> to vector<8xf32>
    %133 = vector.shape_cast %132 : vector<8xf32> to vector<8x1xf32>
    %134 = vector.broadcast %133 : vector<8x1xf32> to vector<8x8xf32>
    %135 = arith.divf %131, %134 : vector<8x8xf32>
    %136 = arith.truncf %135 : vector<8x8xf32> to vector<8x8xbf16>
    %cst_45 = arith.constant dense<0.000000e+00> : vector<8x8xf32>
    %137 = tpu.matmul %136, %125, %cst_45 {dimension_numbers = #tpu.dot_dimension_numbers<[1], [0], [0], [1], [0, 0, 1, 1], [], []>} : vector<8x8xbf16>, vector<8x8xbf16>, vector<8x8xf32> -> vector<8x8xf32>
    %c8_46 = arith.constant 8 : index
    %c0_47 = arith.constant 0 : index
    %138 = vector.load %arg16[%c8_46, %c0_47] : memref<16x32xf32, #tpu.memory_space<vmem>>, vector<8x8xf32>
    tpu.vector_store %arg16[%c8_46, %c0_47], %137 {strides = array<i32>} : memref<16x32xf32, #tpu.memory_space<vmem>>, vector<8x8xf32>,
    %139 = vector.extract_strided_slice %41 {offsets = [8, 8], sizes = [8, 8], strides = [1, 1]} : vector<16x32xf32> to vector<8x8xf32>
    %140 = arith.truncf %139 : vector<8x8xf32> to vector<8x8xbf16>
    %141 = vector.extract_strided_slice %42 {offsets = [8, 8], sizes = [8, 8], strides = [1, 1]} : vector<16x32xf32> to vector<8x8xf32>
    %142 = arith.truncf %141 : vector<8x8xf32> to vector<8x8xbf16>
    %143 = vector.extract_strided_slice %43 {offsets = [8, 8], sizes = [8, 8], strides = [1, 1]} : vector<16x32xf32> to vector<8x8xf32>
    %144 = arith.truncf %143 : vector<8x8xf32> to vector<8x8xbf16>
    "tpu.trace_start"() <{level = 10 : i32, message = "qd,kd->qk"}> : () -> ()
    %cst_48 = arith.constant dense<0.000000e+00> : vector<8x8xf32>
    %145 = tpu.matmul %140, %142, %cst_48 {dimension_numbers = #tpu.dot_dimension_numbers<[1], [1], [0], [0], [0, 0, 1, 0], [], []>} : vector<8x8xbf16>, vector<8x8xbf16>, vector<8x8xf32> -> vector<8x8xf32>
    "tpu.trace_stop"() : () -> ()
    %cst_49 = arith.constant dense<0xFF800000> : vector<8xf32>
    %146 = vector.multi_reduction <maximumf>, %145, %cst_49 [1] : vector<8x8xf32> to vector<8xf32>
    %147 = vector.shape_cast %146 : vector<8xf32> to vector<8x1xf32>
    %148 = vector.broadcast %147 : vector<8x1xf32> to vector<8x8xf32>
    %149 = arith.subf %145, %148 : vector<8x8xf32>
    %150 = math.exp %149 : vector<8x8xf32>
    %cst_50 = arith.constant dense<0.000000e+00> : vector<8xf32>
    %151 = vector.multi_reduction <add>, %150, %cst_50 [1] : vector<8x8xf32> to vector<8xf32>
    %152 = vector.shape_cast %151 : vector<8xf32> to vector<8x1xf32>
    %153 = vector.broadcast %152 : vector<8x1xf32> to vector<8x8xf32>
    %154 = arith.divf %150, %153 : vector<8x8xf32>
    %155 = arith.truncf %154 : vector<8x8xf32> to vector<8x8xbf16>
    %cst_51 = arith.constant dense<0.000000e+00> : vector<8x8xf32>
    %156 = tpu.matmul %155, %144, %cst_51 {dimension_numbers = #tpu.dot_dimension_numbers<[1], [0], [0], [1], [0, 0, 1, 1], [], []>} : vector<8x8xbf16>, vector<8x8xbf16>, vector<8x8xf32> -> vector<8x8xf32>
    %c8_52 = arith.constant 8 : index
    %c8_53 = arith.constant 8 : index
    %157 = vector.load %arg16[%c8_52, %c8_53] : memref<16x32xf32, #tpu.memory_space<vmem>>, vector<8x8xf32>
    tpu.vector_store %arg16[%c8_52, %c8_53], %156 {strides = array<i32>} : memref<16x32xf32, #tpu.memory_space<vmem>>, vector<8x8xf32>,
    %158 = vector.extract_strided_slice %41 {offsets = [8, 16], sizes = [8, 8], strides = [1, 1]} : vector<16x32xf32> to vector<8x8xf32>
    %159 = arith.truncf %158 : vector<8x8xf32> to vector<8x8xbf16>
    %160 = vector.extract_strided_slice %42 {offsets = [8, 16], sizes = [8, 8], strides = [1, 1]} : vector<16x32xf32> to vector<8x8xf32>
    %161 = arith.truncf %160 : vector<8x8xf32> to vector<8x8xbf16>
    %162 = vector.extract_strided_slice %43 {offsets = [8, 16], sizes = [8, 8], strides = [1, 1]} : vector<16x32xf32> to vector<8x8xf32>
    %163 = arith.truncf %162 : vector<8x8xf32> to vector<8x8xbf16>
    "tpu.trace_start"() <{level = 10 : i32, message = "qd,kd->qk"}> : () -> ()
    %cst_54 = arith.constant dense<0.000000e+00> : vector<8x8xf32>
    %164 = tpu.matmul %159, %161, %cst_54 {dimension_numbers = #tpu.dot_dimension_numbers<[1], [1], [0], [0], [0, 0, 1, 0], [], []>} : vector<8x8xbf16>, vector<8x8xbf16>, vector<8x8xf32> -> vector<8x8xf32>
    "tpu.trace_stop"() : () -> ()
    %cst_55 = arith.constant dense<0xFF800000> : vector<8xf32>
    %165 = vector.multi_reduction <maximumf>, %164, %cst_55 [1] : vector<8x8xf32> to vector<8xf32>
    %166 = vector.shape_cast %165 : vector<8xf32> to vector<8x1xf32>
    %167 = vector.broadcast %166 : vector<8x1xf32> to vector<8x8xf32>
    %168 = arith.subf %164, %167 : vector<8x8xf32>
    %169 = math.exp %168 : vector<8x8xf32>
    %cst_56 = arith.constant dense<0.000000e+00> : vector<8xf32>
    %170 = vector.multi_reduction <add>, %169, %cst_56 [1] : vector<8x8xf32> to vector<8xf32>
    %171 = vector.shape_cast %170 : vector<8xf32> to vector<8x1xf32>
    %172 = vector.broadcast %171 : vector<8x1xf32> to vector<8x8xf32>
    %173 = arith.divf %169, %172 : vector<8x8xf32>
    %174 = arith.truncf %173 : vector<8x8xf32> to vector<8x8xbf16>
    %cst_57 = arith.constant dense<0.000000e+00> : vector<8x8xf32>
    %175 = tpu.matmul %174, %163, %cst_57 {dimension_numbers = #tpu.dot_dimension_numbers<[1], [0], [0], [1], [0, 0, 1, 1], [], []>} : vector<8x8xbf16>, vector<8x8xbf16>, vector<8x8xf32> -> vector<8x8xf32>
    %c8_58 = arith.constant 8 : index
    %c16_59 = arith.constant 16 : index
    %176 = vector.load %arg16[%c8_58, %c16_59] : memref<16x32xf32, #tpu.memory_space<vmem>>, vector<8x8xf32>
    tpu.vector_store %arg16[%c8_58, %c16_59], %175 {strides = array<i32>} : memref<16x32xf32, #tpu.memory_space<vmem>>, vector<8x8xf32>,
    %177 = vector.extract_strided_slice %41 {offsets = [8, 24], sizes = [8, 8], strides = [1, 1]} : vector<16x32xf32> to vector<8x8xf32>
    %178 = arith.truncf %177 : vector<8x8xf32> to vector<8x8xbf16>
    %179 = vector.extract_strided_slice %42 {offsets = [8, 24], sizes = [8, 8], strides = [1, 1]} : vector<16x32xf32> to vector<8x8xf32>
    %180 = arith.truncf %179 : vector<8x8xf32> to vector<8x8xbf16>
    %181 = vector.extract_strided_slice %43 {offsets = [8, 24], sizes = [8, 8], strides = [1, 1]} : vector<16x32xf32> to vector<8x8xf32>
    %182 = arith.truncf %181 : vector<8x8xf32> to vector<8x8xbf16>
    "tpu.trace_start"() <{level = 10 : i32, message = "qd,kd->qk"}> : () -> ()
    %cst_60 = arith.constant dense<0.000000e+00> : vector<8x8xf32>
    %183 = tpu.matmul %178, %180, %cst_60 {dimension_numbers = #tpu.dot_dimension_numbers<[1], [1], [0], [0], [0, 0, 1, 0], [], []>} : vector<8x8xbf16>, vector<8x8xbf16>, vector<8x8xf32> -> vector<8x8xf32>
    "tpu.trace_stop"() : () -> ()
    %cst_61 = arith.constant dense<0xFF800000> : vector<8xf32>
    %184 = vector.multi_reduction <maximumf>, %183, %cst_61 [1] : vector<8x8xf32> to vector<8xf32>
    %185 = vector.shape_cast %184 : vector<8xf32> to vector<8x1xf32>
    %186 = vector.broadcast %185 : vector<8x1xf32> to vector<8x8xf32>
    %187 = arith.subf %183, %186 : vector<8x8xf32>
    %188 = math.exp %187 : vector<8x8xf32>
    %cst_62 = arith.constant dense<0.000000e+00> : vector<8xf32>
    %189 = vector.multi_reduction <add>, %188, %cst_62 [1] : vector<8x8xf32> to vector<8xf32>
    %190 = vector.shape_cast %189 : vector<8xf32> to vector<8x1xf32>
    %191 = vector.broadcast %190 : vector<8x1xf32> to vector<8x8xf32>
    %192 = arith.divf %188, %191 : vector<8x8xf32>
    %193 = arith.truncf %192 : vector<8x8xf32> to vector<8x8xbf16>
    %cst_63 = arith.constant dense<0.000000e+00> : vector<8x8xf32>
    %194 = tpu.matmul %193, %182, %cst_63 {dimension_numbers = #tpu.dot_dimension_numbers<[1], [0], [0], [1], [0, 0, 1, 1], [], []>} : vector<8x8xbf16>, vector<8x8xbf16>, vector<8x8xf32> -> vector<8x8xf32>
    %c8_64 = arith.constant 8 : index
    %c24_65 = arith.constant 24 : index
    %195 = vector.load %arg16[%c8_64, %c24_65] : memref<16x32xf32, #tpu.memory_space<vmem>>, vector<8x8xf32>
    tpu.vector_store %arg16[%c8_64, %c24_65], %194 {strides = array<i32>} : memref<16x32xf32, #tpu.memory_space<vmem>>, vector<8x8xf32>,
    %c0_66 = arith.constant 0 : index
    %c0_67 = arith.constant 0 : index
    %196 = vector.load %arg16[%c0_66, %c0_67] : memref<16x32xf32, #tpu.memory_space<vmem>>, vector<16x32xf32>
    %197 = arith.truncf %196 : vector<16x32xf32> to vector<16x32xbf16>
    %c0_68 = arith.constant 0 : index
    %c0_69 = arith.constant 0 : index
    %c0_70 = arith.constant 0 : index
    %198 = vector.load %arg7[%c0_68, %c0_69, %c0_70] : memref<1x32x32xbf16, #tpu.memory_space<vmem>>, vector<1x32x32xbf16>
    %199 = vector.shape_cast %198 : vector<1x32x32xbf16> to vector<32x32xbf16>
    %cst_71 = arith.constant dense<0.000000e+00> : vector<16x32xf32>
    %200 = tpu.matmul %197, %199, %cst_71 {dimension_numbers = #tpu.dot_dimension_numbers<[1], [0], [0], [1], [0, 0, 1, 1], [], []>} : vector<16x32xbf16>, vector<32x32xbf16>, vector<16x32xf32> -> vector<16x32xf32>
    %c0_72 = arith.constant 0 : index
    %c0_73 = arith.constant 0 : index
    %c0_74 = arith.constant 0 : index
    %201 = vector.load %arg8[%c0_72, %c0_73, %c0_74] : memref<1x1x32xf32, #tpu.memory_space<vmem>>, vector<1x1x32xf32>
    %202 = vector.shape_cast %201 : vector<1x1x32xf32> to vector<1x32xf32>
    %203 = vector.broadcast %202 : vector<1x32xf32> to vector<16x32xf32>
    %204 = arith.addf %200, %203 : vector<16x32xf32>
    %205 = arith.addf %4, %204 : vector<16x32xf32>
    %cst_75 = arith.constant dense<0.000000e+00> : vector<16xf32>
    %206 = vector.multi_reduction <add>, %205, %cst_75 [1] : vector<16x32xf32> to vector<16xf32>
    %207 = vector.shape_cast %206 : vector<16xf32> to vector<16x1xf32>
    %cst_76 = arith.constant 3.200000e+01 : f32
    %208 = vector.broadcast %cst_76 : f32 to vector<16x1xf32>
    %209 = arith.divf %207, %208 : vector<16x1xf32>
    %210 = vector.broadcast %209 : vector<16x1xf32> to vector<16x32xf32>
    %211 = arith.subf %205, %210 : vector<16x32xf32>
    %212 = arith.mulf %211, %211 : vector<16x32xf32>
    %cst_77 = arith.constant dense<0.000000e+00> : vector<16xf32>
    %213 = vector.multi_reduction <add>, %212, %cst_77 [1] : vector<16x32xf32> to vector<16xf32>
    %214 = vector.shape_cast %213 : vector<16xf32> to vector<16x1xf32>
    %cst_78 = arith.constant 3.200000e+01 : f32
    %215 = vector.broadcast %cst_78 : f32 to vector<16x1xf32>
    %216 = arith.divf %214, %215 : vector<16x1xf32>
    %217 = vector.broadcast %209 : vector<16x1xf32> to vector<16x32xf32>
    %218 = arith.subf %205, %217 : vector<16x32xf32>
    %cst_79 = arith.constant 9.99999974E-6 : f32
    %219 = vector.broadcast %cst_79 : f32 to vector<16x1xf32>
    %220 = arith.addf %216, %219 : vector<16x1xf32>
    %221 = math.rsqrt %220 : vector<16x1xf32>
    %222 = vector.broadcast %221 : vector<16x1xf32> to vector<16x32xf32>
    %223 = arith.mulf %218, %222 : vector<16x32xf32>
    %c0_80 = arith.constant 0 : index
    %c0_81 = arith.constant 0 : index
    %c0_82 = arith.constant 0 : index
    %224 = vector.load %arg9[%c0_80, %c0_81, %c0_82] : memref<1x1x32xf32, #tpu.memory_space<vmem>>, vector<1x1x32xf32>
    %225 = vector.shape_cast %224 : vector<1x1x32xf32> to vector<1x32xf32>
    %226 = vector.broadcast %225 : vector<1x32xf32> to vector<16x32xf32>
    %227 = arith.mulf %223, %226 : vector<16x32xf32>
    %c0_83 = arith.constant 0 : index
    %c0_84 = arith.constant 0 : index
    %c0_85 = arith.constant 0 : index
    %228 = vector.load %arg10[%c0_83, %c0_84, %c0_85] : memref<1x1x32xf32, #tpu.memory_space<vmem>>, vector<1x1x32xf32>
    %229 = vector.shape_cast %228 : vector<1x1x32xf32> to vector<1x32xf32>
    %230 = vector.broadcast %229 : vector<1x32xf32> to vector<16x32xf32>
    %231 = arith.addf %227, %230 : vector<16x32xf32>
    %232 = arith.truncf %231 : vector<16x32xf32> to vector<16x32xbf16>
    %c0_86 = arith.constant 0 : index
    %c0_87 = arith.constant 0 : index
    %c0_88 = arith.constant 0 : index
    %233 = vector.load %arg11[%c0_86, %c0_87, %c0_88] : memref<1x32x128xbf16, #tpu.memory_space<vmem>>, vector<1x32x128xbf16>
    %234 = vector.shape_cast %233 : vector<1x32x128xbf16> to vector<32x128xbf16>
    %cst_89 = arith.constant dense<0.000000e+00> : vector<16x128xf32>
    %235 = tpu.matmul %232, %234, %cst_89 {dimension_numbers = #tpu.dot_dimension_numbers<[1], [0], [0], [1], [0, 0, 1, 1], [], []>} : vector<16x32xbf16>, vector<32x128xbf16>, vector<16x128xf32> -> vector<16x128xf32>
    %c0_90 = arith.constant 0 : index
    %c0_91 = arith.constant 0 : index
    %c0_92 = arith.constant 0 : index
    %236 = vector.load %arg12[%c0_90, %c0_91, %c0_92] : memref<1x1x128xf32, #tpu.memory_space<vmem>>, vector<1x1x128xf32>
    %237 = vector.shape_cast %236 : vector<1x1x128xf32> to vector<1x128xf32>
    %238 = vector.broadcast %237 : vector<1x128xf32> to vector<16x128xf32>
    %239 = arith.addf %235, %238 : vector<16x128xf32>
    %cst_93 = arith.constant 1.702000e+00 : f32
    %240 = vector.broadcast %cst_93 : f32 to vector<16x128xf32>
    %241 = arith.mulf %240, %239 : vector<16x128xf32>
    %242 = arith.negf %241 : vector<16x128xf32>
    %243 = math.exp %242 : vector<16x128xf32>
    %cst_94 = arith.constant 1.000000e+00 : f32
    %244 = vector.broadcast %cst_94 : f32 to vector<16x128xf32>
    %245 = arith.addf %244, %243 : vector<16x128xf32>
    %246 = arith.divf %244, %245 : vector<16x128xf32>
    %247 = arith.mulf %239, %246 : vector<16x128xf32>
    %248 = arith.truncf %247 : vector<16x128xf32> to vector<16x128xbf16>
    %c0_95 = arith.constant 0 : index
    %c0_96 = arith.constant 0 : index
    %c0_97 = arith.constant 0 : index
    %249 = vector.load %arg13[%c0_95, %c0_96, %c0_97] : memref<1x128x32xbf16, #tpu.memory_space<vmem>>, vector<1x128x32xbf16>
    %250 = vector.shape_cast %249 : vector<1x128x32xbf16> to vector<128x32xbf16>
    %cst_98 = arith.constant dense<0.000000e+00> : vector<16x32xf32>
    %251 = tpu.matmul %248, %250, %cst_98 {dimension_numbers = #tpu.dot_dimension_numbers<[1], [0], [0], [1], [0, 0, 1, 1], [], []>} : vector<16x128xbf16>, vector<128x32xbf16>, vector<16x32xf32> -> vector<16x32xf32>
    %c0_99 = arith.constant 0 : index
    %c0_100 = arith.constant 0 : index
    %c0_101 = arith.constant 0 : index
    %252 = vector.load %arg14[%c0_99, %c0_100, %c0_101] : memref<1x1x32xf32, #tpu.memory_space<vmem>>, vector<1x1x32xf32>
    %253 = vector.shape_cast %252 : vector<1x1x32xf32> to vector<1x32xf32>
    %254 = vector.broadcast %253 : vector<1x32xf32> to vector<16x32xf32>
    %255 = arith.addf %251, %254 : vector<16x32xf32>
    %256 = arith.addf %205, %255 : vector<16x32xf32>
    %257 = vector.shape_cast %256 : vector<16x32xf32> to vector<2x8x32xf32>
    %c0_102 = arith.constant 0 : index
    %c0_103 = arith.constant 0 : index
    %c0_104 = arith.constant 0 : index
    %258 = vector.load %arg15[%c0_102, %c0_103, %c0_104] : memref<2x8x32xf32, #tpu.memory_space<vmem>>, vector<2x8x32xf32>
    tpu.vector_store %arg15[%c0_102, %c0_103, %c0_104], %257 {strides = array<i32>} : memref<2x8x32xf32, #tpu.memory_space<vmem>>, vector<2x8x32xf32>,
    return
  }
  func.func @transform_0(%arg0: i32, %arg1: i32) -> (i32, i32, i32) {
    %c0_i32 = arith.constant 0 : i32
    %c0_i32_0 = arith.constant 0 : i32
    %c0_i32_1 = arith.constant 0 : i32
    return %arg0, %c0_i32, %c0_i32_0 : i32, i32, i32
  }
  func.func @transform_1(%arg0: i32, %arg1: i32) -> (i32, i32, i32) {
    %c0_i32 = arith.constant 0 : i32
    %c0_i32_0 = arith.constant 0 : i32
    %c0_i32_1 = arith.constant 0 : i32
    return %arg1, %c0_i32, %c0_i32_0 : i32, i32, i32
  }
  func.func @transform_2(%arg0: i32, %arg1: i32) -> (i32, i32, i32) {
    %c0_i32 = arith.constant 0 : i32
    %c0_i32_0 = arith.constant 0 : i32
    %c0_i32_1 = arith.constant 0 : i32
    return %arg1, %c0_i32, %c0_i32_0 : i32, i32, i32
  }
  func.func @transform_3(%arg0: i32, %arg1: i32) -> (i32, i32, i32) {
    %c0_i32 = arith.constant 0 : i32
    %c0_i32_0 = arith.constant 0 : i32
    %c0_i32_1 = arith.constant 0 : i32
    return %arg1, %c0_i32, %c0_i32_0 : i32, i32, i32
  }
  func.func @transform_4(%arg0: i32, %arg1: i32) -> (i32, i32, i32) {
    %c0_i32 = arith.constant 0 : i32
    %c0_i32_0 = arith.constant 0 : i32
    %c0_i32_1 = arith.constant 0 : i32
    return %arg1, %c0_i32, %c0_i32_0 : i32, i32, i32
  }
  func.func @transform_5(%arg0: i32, %arg1: i32) -> (i32, i32, i32) {
    %c0_i32 = arith.constant 0 : i32
    %c0_i32_0 = arith.constant 0 : i32
    %c0_i32_1 = arith.constant 0 : i32
    return %arg1, %c0_i32, %c0_i32_0 : i32, i32, i32
  }
  func.func @transform_6(%arg0: i32, %arg1: i32) -> (i32, i32, i32) {
    %c0_i32 = arith.constant 0 : i32
    %c0_i32_0 = arith.constant 0 : i32
    %c0_i32_1 = arith.constant 0 : i32
    return %arg1, %c0_i32, %c0_i32_0 : i32, i32, i32
  }
  func.func @transform_7(%arg0: i32, %arg1: i32) -> (i32, i32, i32) {
    %c0_i32 = arith.constant 0 : i32
    %c0_i32_0 = arith.constant 0 : i32
    %c0_i32_1 = arith.constant 0 : i32
    return %arg1, %c0_i32, %c0_i32_0 : i32, i32, i32
  }
  func.func @transform_8(%arg0: i32, %arg1: i32) -> (i32, i32, i32) {
    %c0_i32 = arith.constant 0 : i32
    %c0_i32_0 = arith.constant 0 : i32
    %c0_i32_1 = arith.constant 0 : i32
    return %arg1, %c0_i32, %c0_i32_0 : i32, i32, i32
  }
  func.func @transform_9(%arg0: i32, %arg1: i32) -> (i32, i32, i32) {
    %c0_i32 = arith.constant 0 : i32
    %c0_i32_0 = arith.constant 0 : i32
    %c0_i32_1 = arith.constant 0 : i32
    return %arg1, %c0_i32, %c0_i32_0 : i32, i32, i32
  }
  func.func @transform_10(%arg0: i32, %arg1: i32) -> (i32, i32, i32) {
    %c0_i32 = arith.constant 0 : i32
    %c0_i32_0 = arith.constant 0 : i32
    %c0_i32_1 = arith.constant 0 : i32
    return %arg1, %c0_i32, %c0_i32_0 : i32, i32, i32
  }
  func.func @transform_11(%arg0: i32, %arg1: i32) -> (i32, i32, i32) {
    %c0_i32 = arith.constant 0 : i32
    %c0_i32_0 = arith.constant 0 : i32
    %c0_i32_1 = arith.constant 0 : i32
    return %arg1, %c0_i32, %c0_i32_0 : i32, i32, i32
  }
  func.func @transform_12(%arg0: i32, %arg1: i32) -> (i32, i32, i32) {
    %c0_i32 = arith.constant 0 : i32
    %c0_i32_0 = arith.constant 0 : i32
    %c0_i32_1 = arith.constant 0 : i32
    return %arg1, %c0_i32, %c0_i32_0 : i32, i32, i32
  }
  func.func @transform_13(%arg0: i32, %arg1: i32) -> (i32, i32, i32) {
    %c0_i32 = arith.constant 0 : i32
    %c0_i32_0 = arith.constant 0 : i32
    %c0_i32_1 = arith.constant 0 : i32
    return %arg0, %c0_i32, %c0_i32_0 : i32, i32, i32
  }
}

</mosaic_0001>

<llo_original>
// kernel: tpu_custom_call.1
$region0: #{tpu_custom_call.1}
  #allocation0 [shape = 'u32[]', space=smem, size = 0x4, offset = 0x4, fixed_abs, tag = 'smem constant byte address 0x4 - core index']
  #allocation1 [shape = 'u32[72,128]{1,0:T(1,128)}', space=vmem, size = 0x9000, scoped, tag = 'internal scratch']
  #allocation2 [shape = 'f32[16,32]{1,0:T(8,128)}', space=vmem, size = 0x2000, scoped, tag = 'scratch operand']
  %s0 = inlined_call_operand.vmem [shape: f32[2,8,32], index: 0, kind: input, shape index: {}]
  %s1 = inlined_call_operand.vmem [shape: f32[2,1,32], index: 1, kind: input, shape index: {}]
  %s2 = inlined_call_operand.vmem [shape: f32[2,1,32], index: 2, kind: input, shape index: {}]
  %s3 = inlined_call_operand.vmem [shape: bf16[2,32,96], index: 3, kind: input, shape index: {}]
  %s4 = inlined_call_operand.vmem [shape: f32[2,1,96], index: 4, kind: input, shape index: {}]
  %s5 = inlined_call_operand.vmem [shape: bf16[2,32,32], index: 5, kind: input, shape index: {}]
  %s6 = inlined_call_operand.vmem [shape: f32[2,1,32], index: 6, kind: input, shape index: {}]
  %s7 = inlined_call_operand.vmem [shape: f32[2,1,32], index: 7, kind: input, shape index: {}]
  %s8 = inlined_call_operand.vmem [shape: f32[2,1,32], index: 8, kind: input, shape index: {}]
  %s9 = inlined_call_operand.vmem [shape: bf16[2,32,128], index: 9, kind: input, shape index: {}]
  %s10 = inlined_call_operand.vmem [shape: f32[2,1,128], index: 10, kind: input, shape index: {}]
  %s11 = inlined_call_operand.vmem [shape: bf16[2,128,32], index: 11, kind: input, shape index: {}]
  %s12 = inlined_call_operand.vmem [shape: f32[2,1,32], index: 12, kind: input, shape index: {}]
  %s13 = inlined_call_operand.hbm [shape: f32[2,8,32], index: 13, kind: output, shape index: {}]
  %s14 = sld [smem:[#allocation0]]
  $region89: #{tpu_custom_call.1} parent=0
    _
  %s16 = ssub.s32 1, %s14
  %s17 = scalar_select 0, %s16, %s14
  $region1: #{tpu_custom_call.1} parent=0
    #allocation3 [shape = 'u8[8192]{0}', space=vmem, size = 0x2000, scoped, tag = 'output window, operand 0, single buffered']
    #allocation4 [shape = 's32[2]{0}', space=sflag, size = 0x8, scoped, tag = 'scoped memory for tpu_custom_call.1']
    %18 = vsyncpa [#allocation4], 0
    loop: start=0, step=1, limit=4
    $region2: #{tpu_custom_call.1} parent=1 // loop_pre_header
      _
    $region3: #{tpu_custom_call.1} parent=1 // loop_header
      %s20 = sphi 0, %s24
      %p21 = scmp.ge.s32.totalorder %s20, 4
      %s27 = sphi 0, %s39
      %s28 = sphi 0, %s35
      %s29 = sphi 0, %s27
      %s30 = sphi 0, %s28
      %s31 = sphi 0, %s29
      %s32 = sphi 0, %s30
      %s42 = sphi 0, %s44
      %s45 = sphi 0, %s42
      %s46 = sphi 0, %s45
      %s62 = sphi 0, %s46
      %s68 = sphi 0, %s70
      %s71 = sphi 0, %s68
      %s72 = sphi 0, %s71
      %s88 = sphi 0, %s72
      %s94 = sphi 0, %s96
      %s97 = sphi 0, %s94
      %s98 = sphi 0, %s97
      %s114 = sphi 0, %s98
      %s120 = sphi 0, %s122
      %s123 = sphi 0, %s120
      %s124 = sphi 0, %s123
      %s140 = sphi 0, %s124
      %s146 = sphi 0, %s148
      %s149 = sphi 0, %s146
      %s150 = sphi 0, %s149
      %s166 = sphi 0, %s150
      %s172 = sphi 0, %s174
      %s175 = sphi 0, %s172
      %s176 = sphi 0, %s175
      %s192 = sphi 0, %s176
      %s198 = sphi 0, %s200
      %s201 = sphi 0, %s198
      %s202 = sphi 0, %s201
      %s218 = sphi 0, %s202
      %s224 = sphi 0, %s226
      %s227 = sphi 0, %s224
      %s228 = sphi 0, %s227
      %s244 = sphi 0, %s228
      %s250 = sphi 0, %s252
      %s253 = sphi 0, %s250
      %s254 = sphi 0, %s253
      %s270 = sphi 0, %s254
      %s276 = sphi 0, %s278
      %s279 = sphi 0, %s276
      %s280 = sphi 0, %s279
      %s296 = sphi 0, %s280
      %s302 = sphi 0, %s304
      %s305 = sphi 0, %s302
      %s306 = sphi 0, %s305
      %s322 = sphi 0, %s306
      %s328 = sphi 0, %s330
      %s331 = sphi 0, %s328
      %s332 = sphi 0, %s331
      %s348 = sphi 0, %s332
      %s354 = sphi 0, %s356
      %s357 = sphi 0, %s354
      %s358 = sphi 0, %s357
      %s374 = sphi 0, %s358
      %s380 = sphi 0, %s382
      %s383 = sphi 0, %s380
      %s384 = sphi 0, %s383
      %s400 = sphi 0, %s384
    $region4: #{tpu_custom_call.1} parent=1 // loop_header_branch
      %23 = sbr.rel (%p21) target = $region8
    $region5: #{tpu_custom_call.1} parent=1 // loop_body
      %s25 = ssub.s32 %s20, 1
      %s26 = ssub.s32 %s20, 2
      %s33 = sadd.s32 1, %s28
      %p34 = scmp.ge.s32.totalorder %s33, 2
      %s35 = scalar_select %p34, 0, %s33
      %s36 = sadd.s32 1, %s27
      %s37 = scalar_select %p34, %s36, %s27
      %p38 = scmp.ge.s32.totalorder %s37, 1
      %s39 = scalar_select %p38, 0, %s37
      %s40 = ssub.s32 %s27, %s39
      %p41 = scmp.eq.s32.totalorder %s40, 0
      %s43 = sadd.s32 %s42, 1
      %s44 = scalar_select %p41, %s42, %s43
      %p47 = pneg %p41
      %p48 = scmp.eq.s32.totalorder %s20, 1
      %p49 = por %p47, %p48
      %p50 = scmp.ne.s32.totalorder %s42, %s45
      %p51 = scmp.eq.s32.totalorder %s20, 0
      %p52 = por %p50, %p51
      %p53 = scmp.ne.s32.totalorder %s42, %s45
      %p54 = scmp.eq.s32.totalorder %s25, 1
      %p55 = por %p53, %p54
      %p56 = scmp.ne.s32.totalorder %s45, %s46
      %p57 = scmp.eq.s32.totalorder %s25, 0
      %p58 = por %p56, %p57
      %p59 = scmp.ne.s32.totalorder %s45, %s46
      %p60 = scmp.eq.s32.totalorder %s26, 1
      %p61 = por %p59, %p60
      %p63 = scmp.ne.s32.totalorder %s46, %s62
      %p64 = scmp.eq.s32.totalorder %s26, 0
      %p65 = por %p63, %p64
      %s66 = ssub.s32 %s28, %s35
      %p67 = scmp.eq.s32.totalorder %s66, 0
      %s69 = sadd.s32 %s68, 1
      %s70 = scalar_select %p67, %s68, %s69
      %p73 = pneg %p67
      %p74 = scmp.eq.s32.totalorder %s20, 1
      %p75 = por %p73, %p74
      %p76 = scmp.ne.s32.totalorder %s68, %s71
      %p77 = scmp.eq.s32.totalorder %s20, 0
      %p78 = por %p76, %p77
      %p79 = scmp.ne.s32.totalorder %s68, %s71
      %p80 = scmp.eq.s32.totalorder %s25, 1
      %p81 = por %p79, %p80
      %p82 = scmp.ne.s32.totalorder %s71, %s72
      %p83 = scmp.eq.s32.totalorder %s25, 0
      %p84 = por %p82, %p83
      %p85 = scmp.ne.s32.totalorder %s71, %s72
      %p86 = scmp.eq.s32.totalorder %s26, 1
      %p87 = por %p85, %p86
      %p89 = scmp.ne.s32.totalorder %s72, %s88
      %p90 = scmp.eq.s32.totalorder %s26, 0
      %p91 = por %p89, %p90
      %s92 = ssub.s32 %s28, %s35
      %p93 = scmp.eq.s32.totalorder %s92, 0
      %s95 = sadd.s32 %s94, 1
      %s96 = scalar_select %p93, %s94, %s95
      %p99 = pneg %p93
      %p100 = scmp.eq.s32.totalorder %s20, 1
      %p101 = por %p99, %p100
      %p102 = scmp.ne.s32.totalorder %s94, %s97
      %p103 = scmp.eq.s32.totalorder %s20, 0
      %p104 = por %p102, %p103
      %p105 = scmp.ne.s32.totalorder %s94, %s97
      %p106 = scmp.eq.s32.totalorder %s25, 1
      %p107 = por %p105, %p106
      %p108 = scmp.ne.s32.totalorder %s97, %s98
      %p109 = scmp.eq.s32.totalorder %s25, 0
      %p110 = por %p108, %p109
      %p111 = scmp.ne.s32.totalorder %s97, %s98
      %p112 = scmp.eq.s32.totalorder %s26, 1
      %p113 = por %p111, %p112
      %p115 = scmp.ne.s32.totalorder %s98, %s114
      %p116 = scmp.eq.s32.totalorder %s26, 0
      %p117 = por %p115, %p116
      %s118 = ssub.s32 %s28, %s35
      %p119 = scmp.eq.s32.totalorder %s118, 0
      %s121 = sadd.s32 %s120, 1
      %s122 = scalar_select %p119, %s120, %s121
      %p125 = pneg %p119
      %p126 = scmp.eq.s32.totalorder %s20, 1
      %p127 = por %p125, %p126
      %p128 = scmp.ne.s32.totalorder %s120, %s123
      %p129 = scmp.eq.s32.totalorder %s20, 0
      %p130 = por %p128, %p129
      %p131 = scmp.ne.s32.totalorder %s120, %s123
      %p132 = scmp.eq.s32.totalorder %s25, 1
      %p133 = por %p131, %p132
      %p134 = scmp.ne.s32.totalorder %s123, %s124
      %p135 = scmp.eq.s32.totalorder %s25, 0
      %p136 = por %p134, %p135
      %p137 = scmp.ne.s32.totalorder %s123, %s124
      %p138 = scmp.eq.s32.totalorder %s26, 1
      %p139 = por %p137, %p138
      %p141 = scmp.ne.s32.totalorder %s124, %s140
      %p142 = scmp.eq.s32.totalorder %s26, 0
      %p143 = por %p141, %p142
      %s144 = ssub.s32 %s28, %s35
      %p145 = scmp.eq.s32.totalorder %s144, 0
      %s147 = sadd.s32 %s146, 1
      %s148 = scalar_select %p145, %s146, %s147
      %p151 = pneg %p145
      %p152 = scmp.eq.s32.totalorder %s20, 1
      %p153 = por %p151, %p152
      %p154 = scmp.ne.s32.totalorder %s146, %s149
      %p155 = scmp.eq.s32.totalorder %s20, 0
      %p156 = por %p154, %p155
      %p157 = scmp.ne.s32.totalorder %s146, %s149
      %p158 = scmp.eq.s32.totalorder %s25, 1
      %p159 = por %p157, %p158
      %p160 = scmp.ne.s32.totalorder %s149, %s150
      %p161 = scmp.eq.s32.totalorder %s25, 0
      %p162 = por %p160, %p161
      %p163 = scmp.ne.s32.totalorder %s149, %s150
      %p164 = scmp.eq.s32.totalorder %s26, 1
      %p165 = por %p163, %p164
      %p167 = scmp.ne.s32.totalorder %s150, %s166
      %p168 = scmp.eq.s32.totalorder %s26, 0
      %p169 = por %p167, %p168
      %s170 = ssub.s32 %s28, %s35
      %p171 = scmp.eq.s32.totalorder %s170, 0
      %s173 = sadd.s32 %s172, 1
      %s174 = scalar_select %p171, %s172, %s173
      %p177 = pneg %p171
      %p178 = scmp.eq.s32.totalorder %s20, 1
      %p179 = por %p177, %p178
      %p180 = scmp.ne.s32.totalorder %s172, %s175
      %p181 = scmp.eq.s32.totalorder %s20, 0
      %p182 = por %p180, %p181
      %p183 = scmp.ne.s32.totalorder %s172, %s175
      %p184 = scmp.eq.s32.totalorder %s25, 1
      %p185 = por %p183, %p184
      %p186 = scmp.ne.s32.totalorder %s175, %s176
      %p187 = scmp.eq.s32.totalorder %s25, 0
      %p188 = por %p186, %p187
      %p189 = scmp.ne.s32.totalorder %s175, %s176
      %p190 = scmp.eq.s32.totalorder %s26, 1
      %p191 = por %p189, %p190
      %p193 = scmp.ne.s32.totalorder %s176, %s192
      %p194 = scmp.eq.s32.totalorder %s26, 0
      %p195 = por %p193, %p194
      %s196 = ssub.s32 %s28, %s35
      %p197 = scmp.eq.s32.totalorder %s196, 0
      %s199 = sadd.s32 %s198, 1
      %s200 = scalar_select %p197, %s198, %s199
      %p203 = pneg %p197
      %p204 = scmp.eq.s32.totalorder %s20, 1
      %p205 = por %p203, %p204
      %p206 = scmp.ne.s32.totalorder %s198, %s201
      %p207 = scmp.eq.s32.totalorder %s20, 0
      %p208 = por %p206, %p207
      %p209 = scmp.ne.s32.totalorder %s198, %s201
      %p210 = scmp.eq.s32.totalorder %s25, 1
      %p211 = por %p209, %p210
      %p212 = scmp.ne.s32.totalorder %s201, %s202
      %p213 = scmp.eq.s32.totalorder %s25, 0
      %p214 = por %p212, %p213
      %p215 = scmp.ne.s32.totalorder %s201, %s202
      %p216 = scmp.eq.s32.totalorder %s26, 1
      %p217 = por %p215, %p216
      %p219 = scmp.ne.s32.totalorder %s202, %s218
      %p220 = scmp.eq.s32.totalorder %s26, 0
      %p221 = por %p219, %p220
      %s222 = ssub.s32 %s28, %s35
      %p223 = scmp.eq.s32.totalorder %s222, 0
      %s225 = sadd.s32 %s224, 1
      %s226 = scalar_select %p223, %s224, %s225
      %p229 = pneg %p223
      %p230 = scmp.eq.s32.totalorder %s20, 1
      %p231 = por %p229, %p230
      %p232 = scmp.ne.s32.totalorder %s224, %s227
      %p233 = scmp.eq.s32.totalorder %s20, 0
      %p234 = por %p232, %p233
      %p235 = scmp.ne.s32.totalorder %s224, %s227
      %p236 = scmp.eq.s32.totalorder %s25, 1
      %p237 = por %p235, %p236
      %p238 = scmp.ne.s32.totalorder %s227, %s228
      %p239 = scmp.eq.s32.totalorder %s25, 0
      %p240 = por %p238, %p239
      %p241 = scmp.ne.s32.totalorder %s227, %s228
      %p242 = scmp.eq.s32.totalorder %s26, 1
      %p243 = por %p241, %p242
      %p245 = scmp.ne.s32.totalorder %s228, %s244
      %p246 = scmp.eq.s32.totalorder %s26, 0
      %p247 = por %p245, %p246
      %s248 = ssub.s32 %s28, %s35
      %p249 = scmp.eq.s32.totalorder %s248, 0
      %s251 = sadd.s32 %s250, 1
      %s252 = scalar_select %p249, %s250, %s251
      %p255 = pneg %p249
      %p256 = scmp.eq.s32.totalorder %s20, 1
      %p257 = por %p255, %p256
      %p258 = scmp.ne.s32.totalorder %s250, %s253
      %p259 = scmp.eq.s32.totalorder %s20, 0
      %p260 = por %p258, %p259
      %p261 = scmp.ne.s32.totalorder %s250, %s253
      %p262 = scmp.eq.s32.totalorder %s25, 1
      %p263 = por %p261, %p262
      %p264 = scmp.ne.s32.totalorder %s253, %s254
      %p265 = scmp.eq.s32.totalorder %s25, 0
      %p266 = por %p264, %p265
      %p267 = scmp.ne.s32.totalorder %s253, %s254
      %p268 = scmp.eq.s32.totalorder %s26, 1
      %p269 = por %p267, %p268
      %p271 = scmp.ne.s32.totalorder %s254, %s270
      %p272 = scmp.eq.s32.totalorder %s26, 0
      %p273 = por %p271, %p272
      %s274 = ssub.s32 %s28, %s35
      %p275 = scmp.eq.s32.totalorder %s274, 0
      %s277 = sadd.s32 %s276, 1
      %s278 = scalar_select %p275, %s276, %s277
      %p281 = pneg %p275
      %p282 = scmp.eq.s32.totalorder %s20, 1
      %p283 = por %p281, %p282
      %p284 = scmp.ne.s32.totalorder %s276, %s279
      %p285 = scmp.eq.s32.totalorder %s20, 0
      %p286 = por %p284, %p285
      %p287 = scmp.ne.s32.totalorder %s276, %s279
      %p288 = scmp.eq.s32.totalorder %s25, 1
      %p289 = por %p287, %p288
      %p290 = scmp.ne.s32.totalorder %s279, %s280
      %p291 = scmp.eq.s32.totalorder %s25, 0
      %p292 = por %p290, %p291
      %p293 = scmp.ne.s32.totalorder %s279, %s280
      %p294 = scmp.eq.s32.totalorder %s26, 1
      %p295 = por %p293, %p294
      %p297 = scmp.ne.s32.totalorder %s280, %s296
      %p298 = scmp.eq.s32.totalorder %s26, 0
      %p299 = por %p297, %p298
      %s300 = ssub.s32 %s28, %s35
      %p301 = scmp.eq.s32.totalorder %s300, 0
      %s303 = sadd.s32 %s302, 1
      %s304 = scalar_select %p301, %s302, %s303
      %p307 = pneg %p301
      %p308 = scmp.eq.s32.totalorder %s20, 1
      %p309 = por %p307, %p308
      %p310 = scmp.ne.s32.totalorder %s302, %s305
      %p311 = scmp.eq.s32.totalorder %s20, 0
      %p312 = por %p310, %p311
      %p313 = scmp.ne.s32.totalorder %s302, %s305
      %p314 = scmp.eq.s32.totalorder %s25, 1
      %p315 = por %p313, %p314
      %p316 = scmp.ne.s32.totalorder %s305, %s306
      %p317 = scmp.eq.s32.totalorder %s25, 0
      %p318 = por %p316, %p317
      %p319 = scmp.ne.s32.totalorder %s305, %s306
      %p320 = scmp.eq.s32.totalorder %s26, 1
      %p321 = por %p319, %p320
      %p323 = scmp.ne.s32.totalorder %s306, %s322
      %p324 = scmp.eq.s32.totalorder %s26, 0
      %p325 = por %p323, %p324
      %s326 = ssub.s32 %s28, %s35
      %p327 = scmp.eq.s32.totalorder %s326, 0
      %s329 = sadd.s32 %s328, 1
      %s330 = scalar_select %p327, %s328, %s329
      %p333 = pneg %p327
      %p334 = scmp.eq.s32.totalorder %s20, 1
      %p335 = por %p333, %p334
      %p336 = scmp.ne.s32.totalorder %s328, %s331
      %p337 = scmp.eq.s32.totalorder %s20, 0
      %p338 = por %p336, %p337
      %p339 = scmp.ne.s32.totalorder %s328, %s331
      %p340 = scmp.eq.s32.totalorder %s25, 1
      %p341 = por %p339, %p340
      %p342 = scmp.ne.s32.totalorder %s331, %s332
      %p343 = scmp.eq.s32.totalorder %s25, 0
      %p344 = por %p342, %p343
      %p345 = scmp.ne.s32.totalorder %s331, %s332
      %p346 = scmp.eq.s32.totalorder %s26, 1
      %p347 = por %p345, %p346
      %p349 = scmp.ne.s32.totalorder %s332, %s348
      %p350 = scmp.eq.s32.totalorder %s26, 0
      %p351 = por %p349, %p350
      %s352 = ssub.s32 %s28, %s35
      %p353 = scmp.eq.s32.totalorder %s352, 0
      %s355 = sadd.s32 %s354, 1
      %s356 = scalar_select %p353, %s354, %s355
      %p359 = pneg %p353
      %p360 = scmp.eq.s32.totalorder %s20, 1
      %p361 = por %p359, %p360
      %p362 = scmp.ne.s32.totalorder %s354, %s357
      %p363 = scmp.eq.s32.totalorder %s20, 0
      %p364 = por %p362, %p363
      %p365 = scmp.ne.s32.totalorder %s354, %s357
      %p366 = scmp.eq.s32.totalorder %s25, 1
      %p367 = por %p365, %p366
      %p368 = scmp.ne.s32.totalorder %s357, %s358
      %p369 = scmp.eq.s32.totalorder %s25, 0
      %p370 = por %p368, %p369
      %p371 = scmp.ne.s32.totalorder %s357, %s358
      %p372 = scmp.eq.s32.totalorder %s26, 1
      %p373 = por %p371, %p372
      %p375 = scmp.ne.s32.totalorder %s358, %s374
      %p376 = scmp.eq.s32.totalorder %s26, 0
      %p377 = por %p375, %p376
      %s378 = ssub.s32 %s27, %s39
      %p379 = scmp.eq.s32.totalorder %s378, 0
      %s381 = sadd.s32 %s380, 1
      %s382 = scalar_select %p379, %s380, %s381
      %p385 = pneg %p379
      %p386 = scmp.eq.s32.totalorder %s20, 1
      %p387 = por %p385, %p386
      %p388 = scmp.ne.s32.totalorder %s380, %s383
      %p389 = scmp.eq.s32.totalorder %s20, 0
      %p390 = por %p388, %p389
      %p391 = scmp.ne.s32.totalorder %s380, %s383
      %p392 = scmp.eq.s32.totalorder %s25, 1
      %p393 = por %p391, %p392
      %p394 = scmp.ne.s32.totalorder %s383, %s384
      %p395 = scmp.eq.s32.totalorder %s25, 0
      %p396 = por %p394, %p395
      %p397 = scmp.ne.s32.totalorder %s383, %s384
      %p398 = scmp.eq.s32.totalorder %s26, 1
      %p399 = por %p397, %p398
      %p401 = scmp.ne.s32.totalorder %s384, %s400
      %p402 = scmp.eq.s32.totalorder %s26, 0
      %p403 = por %p401, %p402
      %p404 = scmp.le.s32.totalorder 1, %s20
      %p405 = scmp.lt.s32.totalorder %s20, 3
      %p406 = pnand %p404, %p405
      %p407 = pneg %p406
      // Predicated region
      $region9: #{tpu_custom_call.1} parent=5 // pred_check
        _
      $region10: #{tpu_custom_call.1} parent=5 // pred_check_branch
        %409 = sbr.rel (%p406) target = $region12
      $region11: #{tpu_custom_call.1} parent=5 // pred_region
        %s410 = ssub.s32 %s20, 1
        // Predicated region
        $region13: #{tpu_custom_call.1} parent=11 // pred_check
          %p411 = pneg %p58
        $region14: #{tpu_custom_call.1} parent=11 // pred_check_branch
          %413 = sbr.rel (%p411) target = $region16
        $region15: #{tpu_custom_call.1} parent=11 // pred_region
          %s414 = smul.u32 2, %s29
          %p415 = scmp.lt.s32.totalorder %s414, 1
          %s416 = scalar_select %p415, %s414, 1
          %s417 = smul.addr %s416, 8
          %s418 = scalar_lea.vmem %s0, %s417
          %s419 = smul.u32 2, %s29
        $region16: #{tpu_custom_call.1} parent=11 // pred_fallthru
          _
      $region12: #{tpu_custom_call.1} parent=5 // pred_fallthru
        _
      %p420 = scmp.lt.s32.totalorder %s20, 2
      // Predicated region
      $region17: #{tpu_custom_call.1} parent=5 // pred_check
        %p421 = pneg %p420
      $region18: #{tpu_custom_call.1} parent=5 // pred_check_branch
        %423 = sbr.rel (%p421) target = $region20
      $region19: #{tpu_custom_call.1} parent=5 // pred_region
        // Predicated region
        $region21: #{tpu_custom_call.1} parent=19 // pred_check
          %p424 = pneg %p78
        $region22: #{tpu_custom_call.1} parent=19 // pred_check_branch
          %426 = sbr.rel (%p424) target = $region24
        $region23: #{tpu_custom_call.1} parent=19 // pred_region
          %p427 = scmp.lt.s32.totalorder %s28, 1
          %s428 = scalar_select %p427, %s28, 1
          %s429 = scalar_lea.vmem %s1, %s428
        $region24: #{tpu_custom_call.1} parent=19 // pred_fallthru
          _
        // Predicated region
        $region25: #{tpu_custom_call.1} parent=19 // pred_check
          %p430 = pneg %p104
        $region26: #{tpu_custom_call.1} parent=19 // pred_check_branch
          %432 = sbr.rel (%p430) target = $region28
        $region27: #{tpu_custom_call.1} parent=19 // pred_region
          %p433 = scmp.lt.s32.totalorder %s28, 1
          %s434 = scalar_select %p433, %s28, 1
          %s435 = scalar_lea.vmem %s2, %s434
        $region28: #{tpu_custom_call.1} parent=19 // pred_fallthru
          _
        // Predicated region
        $region29: #{tpu_custom_call.1} parent=19 // pred_check
          %p436 = pneg %p130
        $region30: #{tpu_custom_call.1} parent=19 // pred_check_branch
          %438 = sbr.rel (%p436) target = $region32
        $region31: #{tpu_custom_call.1} parent=19 // pred_region
          %p439 = scmp.lt.s32.totalorder %s28, 1
          %s440 = scalar_select %p439, %s28, 1
          %s441 = smul.addr %s440, 4
          %s442 = smul.addr %s441, 4
          %s443 = scalar_lea.vmem %s3, %s442
        $region32: #{tpu_custom_call.1} parent=19 // pred_fallthru
          _
        // Predicated region
        $region33: #{tpu_custom_call.1} parent=19 // pred_check
          %p444 = pneg %p156
        $region34: #{tpu_custom_call.1} parent=19 // pred_check_branch
          %446 = sbr.rel (%p444) target = $region36
        $region35: #{tpu_custom_call.1} parent=19 // pred_region
          %p447 = scmp.lt.s32.totalorder %s28, 1
          %s448 = scalar_select %p447, %s28, 1
          %s449 = scalar_lea.vmem %s4, %s448
        $region36: #{tpu_custom_call.1} parent=19 // pred_fallthru
          _
        // Predicated region
        $region37: #{tpu_custom_call.1} parent=19 // pred_check
          %p450 = pneg %p182
        $region38: #{tpu_custom_call.1} parent=19 // pred_check_branch
          %452 = sbr.rel (%p450) target = $region40
        $region39: #{tpu_custom_call.1} parent=19 // pred_region
          %p453 = scmp.lt.s32.totalorder %s28, 1
          %s454 = scalar_select %p453, %s28, 1
          %s455 = smul.addr %s454, 4
          %s456 = smul.addr %s455, 4
          %s457 = scalar_lea.vmem %s5, %s456
        $region40: #{tpu_custom_call.1} parent=19 // pred_fallthru
          _
        // Predicated region
        $region41: #{tpu_custom_call.1} parent=19 // pred_check
          %p458 = pneg %p208
        $region42: #{tpu_custom_call.1} parent=19 // pred_check_branch
          %460 = sbr.rel (%p458) target = $region44
        $region43: #{tpu_custom_call.1} parent=19 // pred_region
          %p461 = scmp.lt.s32.totalorder %s28, 1
          %s462 = scalar_select %p461, %s28, 1
          %s463 = scalar_lea.vmem %s6, %s462
        $region44: #{tpu_custom_call.1} parent=19 // pred_fallthru
          _
        // Predicated region
        $region45: #{tpu_custom_call.1} parent=19 // pred_check
          %p464 = pneg %p234
        $region46: #{tpu_custom_call.1} parent=19 // pred_check_branch
          %466 = sbr.rel (%p464) target = $region48
        $region47: #{tpu_custom_call.1} parent=19 // pred_region
          %p467 = scmp.lt.s32.totalorder %s28, 1
          %s468 = scalar_select %p467, %s28, 1
          %s469 = scalar_lea.vmem %s7, %s468
        $region48: #{tpu_custom_call.1} parent=19 // pred_fallthru
          _
        // Predicated region
        $region49: #{tpu_custom_call.1} parent=19 // pred_check
          %p470 = pneg %p260
        $region50: #{tpu_custom_call.1} parent=19 // pred_check_branch
          %472 = sbr.rel (%p470) target = $region52
        $region51: #{tpu_custom_call.1} parent=19 // pred_region
          %p473 = scmp.lt.s32.totalorder %s28, 1
          %s474 = scalar_select %p473, %s28, 1
          %s475 = scalar_lea.vmem %s8, %s474
        $region52: #{tpu_custom_call.1} parent=19 // pred_fallthru
          _
        // Predicated region
        $region53: #{tpu_custom_call.1} parent=19 // pred_check
          %p476 = pneg %p286
        $region54: #{tpu_custom_call.1} parent=19 // pred_check_branch
          %478 = sbr.rel (%p476) target = $region56
        $region55: #{tpu_custom_call.1} parent=19 // pred_region
          %p479 = scmp.lt.s32.totalorder %s28, 1
          %s480 = scalar_select %p479, %s28, 1
          %s481 = smul.addr %s480, 4
          %s482 = smul.addr %s481, 4
          %s483 = scalar_lea.vmem %s9, %s482
        $region56: #{tpu_custom_call.1} parent=19 // pred_fallthru
          _
        // Predicated region
        $region57: #{tpu_custom_call.1} parent=19 // pred_check
          %p484 = pneg %p312
        $region58: #{tpu_custom_call.1} parent=19 // pred_check_branch
          %486 = sbr.rel (%p484) target = $region60
        $region59: #{tpu_custom_call.1} parent=19 // pred_region
          %p487 = scmp.lt.s32.totalorder %s28, 1
          %s488 = scalar_select %p487, %s28, 1
          %s489 = scalar_lea.vmem %s10, %s488
        $region60: #{tpu_custom_call.1} parent=19 // pred_fallthru
          _
        // Predicated region
        $region61: #{tpu_custom_call.1} parent=19 // pred_check
          %p490 = pneg %p338
        $region62: #{tpu_custom_call.1} parent=19 // pred_check_branch
          %492 = sbr.rel (%p490) target = $region64
        $region63: #{tpu_custom_call.1} parent=19 // pred_region
          %p493 = scmp.lt.s32.totalorder %s28, 1
          %s494 = scalar_select %p493, %s28, 1
          %s495 = smul.addr %s494, 16
          %s496 = smul.addr %s495, 4
          %s497 = scalar_lea.vmem %s11, %s496
        $region64: #{tpu_custom_call.1} parent=19 // pred_fallthru
          _
        // Predicated region
        $region65: #{tpu_custom_call.1} parent=19 // pred_check
          %p498 = pneg %p364
        $region66: #{tpu_custom_call.1} parent=19 // pred_check_branch
          %500 = sbr.rel (%p498) target = $region68
        $region67: #{tpu_custom_call.1} parent=19 // pred_region
          %p501 = scmp.lt.s32.totalorder %s28, 1
          %s502 = scalar_select %p501, %s28, 1
          %s503 = scalar_lea.vmem %s12, %s502
        $region68: #{tpu_custom_call.1} parent=19 // pred_fallthru
          _
      $region20: #{tpu_custom_call.1} parent=5 // pred_fallthru
        _
      %p504 = scmp.le.s32.totalorder 1, %s20
      %p505 = scmp.lt.s32.totalorder %s20, 3
      %p506 = pnand %p504, %p505
      %p507 = pneg %p506
      // Predicated region
      $region69: #{tpu_custom_call.1} parent=5 // pred_check
        _
      $region70: #{tpu_custom_call.1} parent=5 // pred_check_branch
        %509 = sbr.rel (%p506) target = $region72
      $region71: #{tpu_custom_call.1} parent=5 // pred_region
        %s510 = ssub.s32 %s20, 1
        %s511 = smul.u32 2, %s29
        %p512 = scmp.lt.s32.totalorder %s511, 1
        %s513 = scalar_select %p512, %s511, 1
        %s514 = smul.addr %s513, 8
        %s515 = scalar_lea.vmem %s0, %s514
        %p516 = pneg %p58
        %p517 = pneg %p55
        %p518 = scmp.lt.s32.totalorder %s30, 1
        %s519 = scalar_select %p518, %s30, 1
        %s520 = scalar_lea.vmem %s1, %s519
        %p521 = pneg %p84
        %p522 = pneg %p81
        %p523 = scmp.lt.s32.totalorder %s30, 1
        %s524 = scalar_select %p523, %s30, 1
        %s525 = scalar_lea.vmem %s2, %s524
        %p526 = pneg %p110
        %p527 = pneg %p107
        %p528 = scmp.lt.s32.totalorder %s30, 1
        %s529 = scalar_select %p528, %s30, 1
        %s530 = smul.addr %s529, 4
        %s531 = smul.addr %s530, 4
        %s532 = scalar_lea.vmem %s3, %s531
        %p533 = pneg %p136
        %p534 = pneg %p133
        %p535 = scmp.lt.s32.totalorder %s30, 1
        %s536 = scalar_select %p535, %s30, 1
        %s537 = scalar_lea.vmem %s4, %s536
        %p538 = pneg %p162
        %p539 = pneg %p159
        %p540 = scmp.lt.s32.totalorder %s30, 1
        %s541 = scalar_select %p540, %s30, 1
        %s542 = smul.addr %s541, 4
        %s543 = smul.addr %s542, 4
        %s544 = scalar_lea.vmem %s5, %s543
        %p545 = pneg %p188
        %p546 = pneg %p185
        %p547 = scmp.lt.s32.totalorder %s30, 1
        %s548 = scalar_select %p547, %s30, 1
        %s549 = scalar_lea.vmem %s6, %s548
        %p550 = pneg %p214
        %p551 = pneg %p211
        %p552 = scmp.lt.s32.totalorder %s30, 1
        %s553 = scalar_select %p552, %s30, 1
        %s554 = scalar_lea.vmem %s7, %s553
        %p555 = pneg %p240
        %p556 = pneg %p237
        %p557 = scmp.lt.s32.totalorder %s30, 1
        %s558 = scalar_select %p557, %s30, 1
        %s559 = scalar_lea.vmem %s8, %s558
        %p560 = pneg %p266
        %p561 = pneg %p263
        %p562 = scmp.lt.s32.totalorder %s30, 1
        %s563 = scalar_select %p562, %s30, 1
        %s564 = smul.addr %s563, 4
        %s565 = smul.addr %s564, 4
        %s566 = scalar_lea.vmem %s9, %s565
        %p567 = pneg %p292
        %p568 = pneg %p289
        %p569 = scmp.lt.s32.totalorder %s30, 1
        %s570 = scalar_select %p569, %s30, 1
        %s571 = scalar_lea.vmem %s10, %s570
        %p572 = pneg %p318
        %p573 = pneg %p315
        %p574 = scmp.lt.s32.totalorder %s30, 1
        %s575 = scalar_select %p574, %s30, 1
        %s576 = smul.addr %s575, 16
        %s577 = smul.addr %s576, 4
        %s578 = scalar_lea.vmem %s11, %s577
        %p579 = pneg %p344
        %p580 = pneg %p341
        %p581 = scmp.lt.s32.totalorder %s30, 1
        %s582 = scalar_select %p581, %s30, 1
        %s583 = scalar_lea.vmem %s12, %s582
        %p584 = pneg %p370
        %p585 = pneg %p367
        %p586 = pneg %p396
        %p587 = pneg %p393
        %s588 = smul.u32 2, %s29
        %p589 = scmp.lt.s32.totalorder %s588, 1
        %s590 = scalar_select %p589, %s588, 1
        %s591 = smul.addr %s590, 8
        %s592 = scalar_lea.vmem %s0, %s591
        %s593 = smul.u32 2, %s29
        %p594 = scmp.lt.s32.totalorder %s30, 1
        %s595 = scalar_select %p594, %s30, 1
        %s596 = scalar_lea.vmem %s1, %s595
        %p597 = scmp.lt.s32.totalorder %s30, 1
        %s598 = scalar_select %p597, %s30, 1
        %s599 = scalar_lea.vmem %s2, %s598
        %p600 = scmp.lt.s32.totalorder %s30, 1
        %s601 = scalar_select %p600, %s30, 1
        %s602 = smul.addr %s601, 4
        %s603 = smul.addr %s602, 4
        %s604 = scalar_lea.vmem %s3, %s603
        %p605 = scmp.lt.s32.totalorder %s30, 1
        %s606 = scalar_select %p605, %s30, 1
        %s607 = scalar_lea.vmem %s4, %s606
        %p608 = scmp.lt.s32.totalorder %s30, 1
        %s609 = scalar_select %p608, %s30, 1
        %s610 = smul.addr %s609, 4
        %s611 = smul.addr %s610, 4
        %s612 = scalar_lea.vmem %s5, %s611
        %p613 = scmp.lt.s32.totalorder %s30, 1
        %s614 = scalar_select %p613, %s30, 1
        %s615 = scalar_lea.vmem %s6, %s614
        %p616 = scmp.lt.s32.totalorder %s30, 1
        %s617 = scalar_select %p616, %s30, 1
        %s618 = scalar_lea.vmem %s7, %s617
        %p619 = scmp.lt.s32.totalorder %s30, 1
        %s620 = scalar_select %p619, %s30, 1
        %s621 = scalar_lea.vmem %s8, %s620
        %p622 = scmp.lt.s32.totalorder %s30, 1
        %s623 = scalar_select %p622, %s30, 1
        %s624 = smul.addr %s623, 4
        %s625 = smul.addr %s624, 4
        %s626 = scalar_lea.vmem %s9, %s625
        %p627 = scmp.lt.s32.totalorder %s30, 1
        %s628 = scalar_select %p627, %s30, 1
        %s629 = scalar_lea.vmem %s10, %s628
        %p630 = scmp.lt.s32.totalorder %s30, 1
        %s631 = scalar_select %p630, %s30, 1
        %s632 = smul.addr %s631, 16
        %s633 = smul.addr %s632, 4
        %s634 = scalar_lea.vmem %s11, %s633
        %p635 = scmp.lt.s32.totalorder %s30, 1
        %s636 = scalar_select %p635, %s30, 1
        %s637 = scalar_lea.vmem %s12, %s636
        %s638 = smul.u32 2, %s29
        %p640 = scmp.eq.s32.totalorder %s30, 0
        // Predicated region
        $region73: #{tpu_custom_call.1} parent=71 // pred_check
          %p641 = pneg %p640
        $region74: #{tpu_custom_call.1} parent=71 // pred_check_branch
          %643 = sbr.rel (%p641) target = $region76
        $region75: #{tpu_custom_call.1} parent=71 // pred_region
          %v644 = vld [vmem:[%s592] sm:$0xff]
          %v645 = vld [vmem:[%s592 + $0x8] sm:$0xff]
          %vm646 = vcmask 261120
          %647 = vst.msk [vmem:[#allocation3] sm:$0xff] %vm646, %v644
          %648 = vst.msk [vmem:[#allocation3 + $0x8] sm:$0xff] %vm646, %v645
        $region76: #{tpu_custom_call.1} parent=71 // pred_fallthru
          _
        %v649 = vld [vmem:[#allocation3] sm:$0xff]
        %v650 = vld [vmem:[#allocation3 + $0x8] sm:$0xff]
        %vm651 = vcmask 261120
        %v652 = vsel %vm651, %v649, 0.0
        %653 = vadd.xlane.f32.xlu0 %v652
        %v654 = vpop.xlane.xlu0 %653
        %v655 = vsel %vm651, %v650, 0.0
        %656 = vadd.xlane.f32.xlu0 %v655
        %v657 = vpop.xlane.xlu0 %656
        %v658 = vrcp.pop 32.0
        %v659 = vmul.f32 32.0, %v658
        %v660 = vsub.f32 1.0, %v659
        %v661 = vmul.f32 %v658, %v660
        %v662 = vadd.f32 %v658, %v661
        %vm663 = vweird.f32 %v658
        %v664 = vsel %vm663, %v658, %v662
        %v665 = vmul.f32 %v654, %v664
        %v666 = vmul.f32 %v657, %v664
        %v667 = vsub.f32 %v649, %v665
        %v668 = vsub.f32 %v650, %v666
        %v669 = vmul.f32 %v667, %v667
        %v670 = vmul.f32 %v668, %v668
        %v671 = vsel %vm651, %v669, 0.0
        %672 = vadd.xlane.f32.xlu0 %v671
        %v673 = vpop.xlane.xlu0 %672
        %v674 = vsel %vm651, %v670, 0.0
        %675 = vadd.xlane.f32.xlu0 %v674
        %v676 = vpop.xlane.xlu0 %675
        %v677 = vmul.f32 %v673, %v664
        %v678 = vmul.f32 %v676, %v664
        %v679 = vadd.f32 %v677, 1e-05
        %v680 = vadd.f32 %v678, 1e-05
        %v681 = vrsqrt.pop %v679
        %v682 = vmul.f32 %v681, %v679
        %v683 = vmul.f32 %v682, %v681
        %v684 = vmul.f32 0.5, %v683
        %v685 = vsub.f32 1.5, %v684
        %v686 = vmul.f32 %v681, %v685
        %vm687 = vweird.f32 %v679
        %vm688 = vweird.f32 %v681
        %vm689 = vmor %vm687, %vm688
        %v690 = vsel %vm689, %v681, %v686
        %v691 = vrsqrt.pop %v680
        %v692 = vmul.f32 %v691, %v680
        %v693 = vmul.f32 %v692, %v691
        %v694 = vmul.f32 0.5, %v693
        %v695 = vsub.f32 1.5, %v694
        %v696 = vmul.f32 %v691, %v695
        %vm697 = vweird.f32 %v680
        %vm698 = vweird.f32 %v691
        %vm699 = vmor %vm697, %vm698
        %v700 = vsel %vm699, %v691, %v696
        %v701 = vmul.f32 %v667, %v690
        %v702 = vmul.f32 %v668, %v700
        %v703 = vld [vmem:[%s596] sm:$0x1]
        %v705 = vperm.slane %v703, 0
        %v707 = vmul.f32 %v701, %v705
        %v708 = vmul.f32 %v702, %v705
        %v709 = vld [vmem:[%s599] sm:$0x1]
        %v711 = vperm.slane %v709, 0
        %v713 = vadd.f32 %v707, %v711
        %v714 = vadd.f32 %v708, %v711
        %v715 = vpack.c.bf16 %v714, %v713
        %v716 = vld [vmem:[%s604] sm:$0xf]
        %v717 = vld [vmem:[%s604 + $0x4] sm:$0xf]
        %v718 = vld [vmem:[%s604 + $0x8] sm:$0xf]
        %v719 = vld [vmem:[%s604 + $0xc] sm:$0xf]
        %v720 = vld [vmem:[%s607] sm:$0x1]
        %v722 = vperm.slane %v720, 0
        %v728 = vunpack.c.l.b16 %v716
        %v729 = vunpack.c.l.b16 %v717
        %v730 = vunpack.c.l.b16 %v718
        %v731 = vunpack.c.l.b16 %v719
        %v732 = vpack.c.b16 %v729, %v728
        %v733 = vpack.c.b16 %v731, %v730
        %v737 = vsel %vm651, %v715, 0
        %739 = vmatpush.bf16.msra.mxu0 0
        %740 = vmatpush.bf16.msra.mxu0 0
        %741 = vmatpush.bf16.msra.mxu0 0
        %742 = vmatpush.bf16.msra.mxu0 0
        %743 = vmatpush.bf16.msra.mxu0 0
        %744 = vmatpush.bf16.msra.mxu0 0
        %745 = vmatpush.bf16.msra.mxu0 %v733
        %746 = vmatpush.bf16.msra.mxu0 %v732
        %747 = vmatmul.bf16.gmra.mxu0 %v737
        %v748 = vpop.f32.mrf.mxu0
        %v749 = vadd.f32 %v722, %v748
        %v750 = vpop.f32.mrf.mxu0
        %v751 = vadd.f32 %v722, %v750
        %752 = vdwg.mxu0
        %v753 = vmul.f32 %v749, 0.35355338
        %v754 = vmul.f32 %v751, 0.35355338
        %v755 = vpack.c.bf16 %v753, %v753
        %v756 = vpack.c.bf16 %v749, %v749
        %758 = vrot.lane.b32.xlu0 %v756, 96
        %v759 = vpop.permute.xlu0 %758
        %vm760 = vcmask 64512
        %v762 = vsel %vm760, %v755, 0
        %v765 = vsel %vm760, %v759, 0
        %767 = vmatpush.bf16.xpose.msra.mxu0 0
        %768 = vmatpush.bf16.xpose.msra.mxu0 0
        %769 = vmatpush.bf16.xpose.msra.mxu0 0
        %770 = vmatpush.bf16.xpose.msra.mxu0 0
        %771 = vmatpush.bf16.xpose.msra.mxu0 0
        %772 = vmatpush.bf16.xpose.msra.mxu0 0
        %773 = vmatpush.bf16.xpose.msra.mxu0 0
        %774 = vmatpush.bf16.xpose.msra.mxu0 %v765
        %775 = vmatmul.bf16.gmra.mxu0 %v762
        %v776 = vpop.f32.mrf.mxu0
        %v777 = vadd.f32 0.0, %v776
        %v778 = vpop.f32.mrf.mxu0
        %779 = vdwg.mxu0
        %v780 = vsel %vm760, %v777, -inf
        %781 = vmax.xlane.f32.xlu0 %v780
        %v782 = vpop.xlane.xlu0 %781
        %v783 = vsub.f32 %v777, %v782
        %v784 = vmul.f32 %v783, 1.442695
        %v785 = vpow.pop %v784
        %v786 = vsel %vm760, %v785, 0.0
        %787 = vadd.xlane.f32.xlu0 %v786
        %v788 = vpop.xlane.xlu0 %787
        %v789 = vrcp.pop %v788
        %v790 = vmul.f32 %v788, %v789
        %v791 = vsub.f32 1.0, %v790
        %v792 = vmul.f32 %v789, %v791
        %v793 = vadd.f32 %v789, %v792
        %vm794 = vweird.f32 %v788
        %vm795 = vweird.f32 %v789
        %vm796 = vmor %vm794, %vm795
        %v797 = vsel %vm796, %v789, %v793
        %v798 = vand.u32 2147483647, %v788
        %vm799 = vcmp.eq.f32.partialorder %v798, 8.507059e+37
        %v800 = vand.u32 %v788, 2147483648
        %v801 = vor.u32 1.1754944e-38, %v800
        %v802 = vsel %vm799, %v801, %v797
        %v803 = vmul.f32 %v785, %v802
        %v804 = vpack.c.bf16 %v803, %v803
        %805 = vrot.lane.b32.xlu0 %v756, 64
        %v806 = vpop.permute.xlu0 %805
        %v808 = vsel %vm760, %v804, 0
        %vm810 = vcmask 1043456
        %v812 = vsel %vm810, %v806, 0
        %814 = vmatpush.bf16.msra.mxu0 0
        %815 = vmatpush.bf16.msra.mxu0 0
        %816 = vmatpush.bf16.msra.mxu0 0
        %817 = vmatpush.bf16.msra.mxu0 0
        %818 = vmatpush.bf16.msra.mxu0 0
        %819 = vmatpush.bf16.msra.mxu0 0
        %820 = vmatpush.bf16.msra.mxu0 0
        %821 = vmatpush.bf16.msra.mxu0 %v812
        %822 = vmatmul.bf16.gmra.mxu0 %v808
        %v823 = vpop.f32.mrf.mxu0
        %v824 = vadd.f32 0.0, %v823
        %v825 = vpop.f32.mrf.mxu0
        %826 = vdwg.mxu0
        %827 = vst.msk [vmem:[#allocation2] sm:$0xff] %vm760, %v824
        %829 = vrot.lane.b32.xlu0 %v755, 120
        %v830 = vpop.permute.xlu0 %829
        %831 = vrot.lane.b32.xlu0 %v756, 88
        %v832 = vpop.permute.xlu0 %831
        %v834 = vsel %vm760, %v830, 0
        %v837 = vsel %vm760, %v832, 0
        %839 = vmatpush.bf16.xpose.msra.mxu0 0
        %840 = vmatpush.bf16.xpose.msra.mxu0 0
        %841 = vmatpush.bf16.xpose.msra.mxu0 0
        %842 = vmatpush.bf16.xpose.msra.mxu0 0
        %843 = vmatpush.bf16.xpose.msra.mxu0 0
        %844 = vmatpush.bf16.xpose.msra.mxu0 0
        %845 = vmatpush.bf16.xpose.msra.mxu0 0
        %846 = vmatpush.bf16.xpose.msra.mxu0 %v837
        %847 = vmatmul.bf16.gmra.mxu0 %v834
        %v848 = vpop.f32.mrf.mxu0
        %v849 = vadd.f32 0.0, %v848
        %v850 = vpop.f32.mrf.mxu0
        %851 = vdwg.mxu0
        %v852 = vsel %vm760, %v849, -inf
        %853 = vmax.xlane.f32.xlu0 %v852
        %v854 = vpop.xlane.xlu0 %853
        %v855 = vsub.f32 %v849, %v854
        %v856 = vmul.f32 %v855, 1.442695
        %v857 = vpow.pop %v856
        %v858 = vsel %vm760, %v857, 0.0
        %859 = vadd.xlane.f32.xlu0 %v858
        %v860 = vpop.xlane.xlu0 %859
        %v861 = vrcp.pop %v860
        %v862 = vmul.f32 %v860, %v861
        %v863 = vsub.f32 1.0, %v862
        %v864 = vmul.f32 %v861, %v863
        %v865 = vadd.f32 %v861, %v864
        %vm866 = vweird.f32 %v860
        %vm867 = vweird.f32 %v861
        %vm868 = vmor %vm866, %vm867
        %v869 = vsel %vm868, %v861, %v865
        %v870 = vand.u32 2147483647, %v860
        %vm871 = vcmp.eq.f32.partialorder %v870, 8.507059e+37
        %v872 = vand.u32 %v860, 2147483648
        %v873 = vor.u32 1.1754944e-38, %v872
        %v874 = vsel %vm871, %v873, %v869
        %v875 = vmul.f32 %v857, %v874
        %v876 = vpack.c.bf16 %v875, %v875
        %877 = vrot.lane.b32.xlu0 %v756, 56
        %v878 = vpop.permute.xlu0 %877
        %v880 = vsel %vm760, %v876, 0
        %v883 = vsel %vm810, %v878, 0
        %885 = vmatpush.bf16.msra.mxu0 0
        %886 = vmatpush.bf16.msra.mxu0 0
        %887 = vmatpush.bf16.msra.mxu0 0
        %888 = vmatpush.bf16.msra.mxu0 0
        %889 = vmatpush.bf16.msra.mxu0 0
        %890 = vmatpush.bf16.msra.mxu0 0
        %891 = vmatpush.bf16.msra.mxu0 0
        %892 = vmatpush.bf16.msra.mxu0 %v883
        %893 = vmatmul.bf16.gmra.mxu0 %v880
        %v894 = vpop.f32.mrf.mxu0
        %v895 = vadd.f32 0.0, %v894
        %v896 = vpop.f32.mrf.mxu0
        %897 = vdwg.mxu0
        %899 = vrot.lane.b32.xlu0 %v895, 8
        %v900 = vpop.permute.xlu0 %899
        %vm902 = vcmask 130112
        %903 = vst.msk [vmem:[#allocation2] sm:$0xff] %vm902, %v900
        %904 = vrot.lane.b32.xlu0 %v755, 112
        %v905 = vpop.permute.xlu0 %904
        %906 = vrot.lane.b32.xlu0 %v756, 80
        %v907 = vpop.permute.xlu0 %906
        %v909 = vsel %vm760, %v905, 0
        %v912 = vsel %vm760, %v907, 0
        %914 = vmatpush.bf16.xpose.msra.mxu0 0
        %915 = vmatpush.bf16.xpose.msra.mxu0 0
        %916 = vmatpush.bf16.xpose.msra.mxu0 0
        %917 = vmatpush.bf16.xpose.msra.mxu0 0
        %918 = vmatpush.bf16.xpose.msra.mxu0 0
        %919 = vmatpush.bf16.xpose.msra.mxu0 0
        %920 = vmatpush.bf16.xpose.msra.mxu0 0
        %921 = vmatpush.bf16.xpose.msra.mxu0 %v912
        %922 = vmatmul.bf16.gmra.mxu0 %v909
        %v923 = vpop.f32.mrf.mxu0
        %v924 = vadd.f32 0.0, %v923
        %v925 = vpop.f32.mrf.mxu0
        %926 = vdwg.mxu0
        %v927 = vsel %vm760, %v924, -inf
        %928 = vmax.xlane.f32.xlu0 %v927
        %v929 = vpop.xlane.xlu0 %928
        %v930 = vsub.f32 %v924, %v929
        %v931 = vmul.f32 %v930, 1.442695
        %v932 = vpow.pop %v931
        %v933 = vsel %vm760, %v932, 0.0
        %934 = vadd.xlane.f32.xlu0 %v933
        %v935 = vpop.xlane.xlu0 %934
        %v936 = vrcp.pop %v935
        %v937 = vmul.f32 %v935, %v936
        %v938 = vsub.f32 1.0, %v937
        %v939 = vmul.f32 %v936, %v938
        %v940 = vadd.f32 %v936, %v939
        %vm941 = vweird.f32 %v935
        %vm942 = vweird.f32 %v936
        %vm943 = vmor %vm941, %vm942
        %v944 = vsel %vm943, %v936, %v940
        %v945 = vand.u32 2147483647, %v935
        %vm946 = vcmp.eq.f32.partialorder %v945, 8.507059e+37
        %v947 = vand.u32 %v935, 2147483648
        %v948 = vor.u32 1.1754944e-38, %v947
        %v949 = vsel %vm946, %v948, %v944
        %v950 = vmul.f32 %v932, %v949
        %v951 = vpack.c.bf16 %v950, %v950
        %952 = vrot.lane.b32.xlu0 %v756, 48
        %v953 = vpop.permute.xlu0 %952
        %v955 = vsel %vm760, %v951, 0
        %v958 = vsel %vm810, %v953, 0
        %960 = vmatpush.bf16.msra.mxu0 0
        %961 = vmatpush.bf16.msra.mxu0 0
        %962 = vmatpush.bf16.msra.mxu0 0
        %963 = vmatpush.bf16.msra.mxu0 0
        %964 = vmatpush.bf16.msra.mxu0 0
        %965 = vmatpush.bf16.msra.mxu0 0
        %966 = vmatpush.bf16.msra.mxu0 0
        %967 = vmatpush.bf16.msra.mxu0 %v958
        %968 = vmatmul.bf16.gmra.mxu0 %v955
        %v969 = vpop.f32.mrf.mxu0
        %v970 = vadd.f32 0.0, %v969
        %v971 = vpop.f32.mrf.mxu0
        %972 = vdwg.mxu0
        %974 = vrot.lane.b32.xlu0 %v970, 16
        %v975 = vpop.permute.xlu0 %974
        %vm977 = vcmask 195712
        %978 = vst.msk [vmem:[#allocation2] sm:$0xff] %vm977, %v975
        %979 = vrot.lane.b32.xlu0 %v755, 104
        %v980 = vpop.permute.xlu0 %979
        %981 = vrot.lane.b32.xlu0 %v756, 72
        %v982 = vpop.permute.xlu0 %981
        %v984 = vsel %vm760, %v980, 0
        %v987 = vsel %vm760, %v982, 0
        %989 = vmatpush.bf16.xpose.msra.mxu0 0
        %990 = vmatpush.bf16.xpose.msra.mxu0 0
        %991 = vmatpush.bf16.xpose.msra.mxu0 0
        %992 = vmatpush.bf16.xpose.msra.mxu0 0
        %993 = vmatpush.bf16.xpose.msra.mxu0 0
        %994 = vmatpush.bf16.xpose.msra.mxu0 0
        %995 = vmatpush.bf16.xpose.msra.mxu0 0
        %996 = vmatpush.bf16.xpose.msra.mxu0 %v987
        %997 = vmatmul.bf16.gmra.mxu0 %v984
        %v998 = vpop.f32.mrf.mxu0
        %v999 = vadd.f32 0.0, %v998
        %v1000 = vpop.f32.mrf.mxu0
        %1001 = vdwg.mxu0
        %v1002 = vsel %vm760, %v999, -inf
        %1003 = vmax.xlane.f32.xlu0 %v1002
        %v1004 = vpop.xlane.xlu0 %1003
        %v1005 = vsub.f32 %v999, %v1004
        %v1006 = vmul.f32 %v1005, 1.442695
        %v1007 = vpow.pop %v1006
        %v1008 = vsel %vm760, %v1007, 0.0
        %1009 = vadd.xlane.f32.xlu0 %v1008
        %v1010 = vpop.xlane.xlu0 %1009
        %v1011 = vrcp.pop %v1010
        %v1012 = vmul.f32 %v1010, %v1011
        %v1013 = vsub.f32 1.0, %v1012
        %v1014 = vmul.f32 %v1011, %v1013
        %v1015 = vadd.f32 %v1011, %v1014
        %vm1016 = vweird.f32 %v1010
        %vm1017 = vweird.f32 %v1011
        %vm1018 = vmor %vm1016, %vm1017
        %v1019 = vsel %vm1018, %v1011, %v1015
        %v1020 = vand.u32 2147483647, %v1010
        %vm1021 = vcmp.eq.f32.partialorder %v1020, 8.507059e+37
        %v1022 = vand.u32 %v1010, 2147483648
        %v1023 = vor.u32 1.1754944e-38, %v1022
        %v1024 = vsel %vm1021, %v1023, %v1019
        %v1025 = vmul.f32 %v1007, %v1024
        %v1026 = vpack.c.bf16 %v1025, %v1025
        %1027 = vrot.lane.b32.xlu0 %v756, 40
        %v1028 = vpop.permute.xlu0 %1027
        %v1030 = vsel %vm760, %v1026, 0
        %v1033 = vsel %vm810, %v1028, 0
        %1035 = vmatpush.bf16.msra.mxu0 0
        %1036 = vmatpush.bf16.msra.mxu0 0
        %1037 = vmatpush.bf16.msra.mxu0 0
        %1038 = vmatpush.bf16.msra.mxu0 0
        %1039 = vmatpush.bf16.msra.mxu0 0
        %1040 = vmatpush.bf16.msra.mxu0 0
        %1041 = vmatpush.bf16.msra.mxu0 0
        %1042 = vmatpush.bf16.msra.mxu0 %v1033
        %1043 = vmatmul.bf16.gmra.mxu0 %v1030
        %v1044 = vpop.f32.mrf.mxu0
        %v1045 = vadd.f32 0.0, %v1044
        %v1046 = vpop.f32.mrf.mxu0
        %1047 = vdwg.mxu0
        %1049 = vrot.lane.b32.xlu0 %v1045, 24
        %v1050 = vpop.permute.xlu0 %1049
        %vm1052 = vcmask 261312
        %1053 = vst.msk [vmem:[#allocation2] sm:$0xff] %vm1052, %v1050
        %v1054 = vpack.c.bf16 %v754, %v754
        %v1055 = vpack.c.bf16 %v751, %v751
        %1057 = vrot.lane.b32.xlu0 %v1055, 96
        %v1058 = vpop.permute.xlu0 %1057
        %v1060 = vsel %vm760, %v1054, 0
        %v1063 = vsel %vm760, %v1058, 0
        %1065 = vmatpush.bf16.xpose.msra.mxu0 0
        %1066 = vmatpush.bf16.xpose.msra.mxu0 0
        %1067 = vmatpush.bf16.xpose.msra.mxu0 0
        %1068 = vmatpush.bf16.xpose.msra.mxu0 0
        %1069 = vmatpush.bf16.xpose.msra.mxu0 0
        %1070 = vmatpush.bf16.xpose.msra.mxu0 0
        %1071 = vmatpush.bf16.xpose.msra.mxu0 0
        %1072 = vmatpush.bf16.xpose.msra.mxu0 %v1063
        %1073 = vmatmul.bf16.gmra.mxu0 %v1060
        %v1074 = vpop.f32.mrf.mxu0
        %v1075 = vadd.f32 0.0, %v1074
        %v1076 = vpop.f32.mrf.mxu0
        %1077 = vdwg.mxu0
        %v1078 = vsel %vm760, %v1075, -inf
        %1079 = vmax.xlane.f32.xlu0 %v1078
        %v1080 = vpop.xlane.xlu0 %1079
        %v1081 = vsub.f32 %v1075, %v1080
        %v1082 = vmul.f32 %v1081, 1.442695
        %v1083 = vpow.pop %v1082
        %v1084 = vsel %vm760, %v1083, 0.0
        %1085 = vadd.xlane.f32.xlu0 %v1084
        %v1086 = vpop.xlane.xlu0 %1085
        %v1087 = vrcp.pop %v1086
        %v1088 = vmul.f32 %v1086, %v1087
        %v1089 = vsub.f32 1.0, %v1088
        %v1090 = vmul.f32 %v1087, %v1089
        %v1091 = vadd.f32 %v1087, %v1090
        %vm1092 = vweird.f32 %v1086
        %vm1093 = vweird.f32 %v1087
        %vm1094 = vmor %vm1092, %vm1093
        %v1095 = vsel %vm1094, %v1087, %v1091
        %v1096 = vand.u32 2147483647, %v1086
        %vm1097 = vcmp.eq.f32.partialorder %v1096, 8.507059e+37
        %v1098 = vand.u32 %v1086, 2147483648
        %v1099 = vor.u32 1.1754944e-38, %v1098
        %v1100 = vsel %vm1097, %v1099, %v1095
        %v1101 = vmul.f32 %v1083, %v1100
        %v1102 = vpack.c.bf16 %v1101, %v1101
        %1103 = vrot.lane.b32.xlu0 %v1055, 64
        %v1104 = vpop.permute.xlu0 %1103
        %v1106 = vsel %vm760, %v1102, 0
        %v1109 = vsel %vm810, %v1104, 0
        %1111 = vmatpush.bf16.msra.mxu0 0
        %1112 = vmatpush.bf16.msra.mxu0 0
        %1113 = vmatpush.bf16.msra.mxu0 0
        %1114 = vmatpush.bf16.msra.mxu0 0
        %1115 = vmatpush.bf16.msra.mxu0 0
        %1116 = vmatpush.bf16.msra.mxu0 0
        %1117 = vmatpush.bf16.msra.mxu0 0
        %1118 = vmatpush.bf16.msra.mxu0 %v1109
        %1119 = vmatmul.bf16.gmra.mxu0 %v1106
        %v1120 = vpop.f32.mrf.mxu0
        %v1121 = vadd.f32 0.0, %v1120
        %v1122 = vpop.f32.mrf.mxu0
        %1123 = vdwg.mxu0
        %1124 = vst.msk [vmem:[#allocation2 + $0x8] sm:$0xff] %vm760, %v1121
        %1126 = vrot.lane.b32.xlu0 %v1054, 120
        %v1127 = vpop.permute.xlu0 %1126
        %1128 = vrot.lane.b32.xlu0 %v1055, 88
        %v1129 = vpop.permute.xlu0 %1128
        %v1131 = vsel %vm760, %v1127, 0
        %v1134 = vsel %vm760, %v1129, 0
        %1136 = vmatpush.bf16.xpose.msra.mxu0 0
        %1137 = vmatpush.bf16.xpose.msra.mxu0 0
        %1138 = vmatpush.bf16.xpose.msra.mxu0 0
        %1139 = vmatpush.bf16.xpose.msra.mxu0 0
        %1140 = vmatpush.bf16.xpose.msra.mxu0 0
        %1141 = vmatpush.bf16.xpose.msra.mxu0 0
        %1142 = vmatpush.bf16.xpose.msra.mxu0 0
        %1143 = vmatpush.bf16.xpose.msra.mxu0 %v1134
        %1144 = vmatmul.bf16.gmra.mxu0 %v1131
        %v1145 = vpop.f32.mrf.mxu0
        %v1146 = vadd.f32 0.0, %v1145
        %v1147 = vpop.f32.mrf.mxu0
        %1148 = vdwg.mxu0
        %v1149 = vsel %vm760, %v1146, -inf
        %1150 = vmax.xlane.f32.xlu0 %v1149
        %v1151 = vpop.xlane.xlu0 %1150
        %v1152 = vsub.f32 %v1146, %v1151
        %v1153 = vmul.f32 %v1152, 1.442695
        %v1154 = vpow.pop %v1153
        %v1155 = vsel %vm760, %v1154, 0.0
        %1156 = vadd.xlane.f32.xlu0 %v1155
        %v1157 = vpop.xlane.xlu0 %1156
        %v1158 = vrcp.pop %v1157
        %v1159 = vmul.f32 %v1157, %v1158
        %v1160 = vsub.f32 1.0, %v1159
        %v1161 = vmul.f32 %v1158, %v1160
        %v1162 = vadd.f32 %v1158, %v1161
        %vm1163 = vweird.f32 %v1157
        %vm1164 = vweird.f32 %v1158
        %vm1165 = vmor %vm1163, %vm1164
        %v1166 = vsel %vm1165, %v1158, %v1162
        %v1167 = vand.u32 2147483647, %v1157
        %vm1168 = vcmp.eq.f32.partialorder %v1167, 8.507059e+37
        %v1169 = vand.u32 %v1157, 2147483648
        %v1170 = vor.u32 1.1754944e-38, %v1169
        %v1171 = vsel %vm1168, %v1170, %v1166
        %v1172 = vmul.f32 %v1154, %v1171
        %v1173 = vpack.c.bf16 %v1172, %v1172
        %1174 = vrot.lane.b32.xlu0 %v1055, 56
        %v1175 = vpop.permute.xlu0 %1174
        %v1177 = vsel %vm760, %v1173, 0
        %v1180 = vsel %vm810, %v1175, 0
        %1182 = vmatpush.bf16.msra.mxu0 0
        %1183 = vmatpush.bf16.msra.mxu0 0
        %1184 = vmatpush.bf16.msra.mxu0 0
        %1185 = vmatpush.bf16.msra.mxu0 0
        %1186 = vmatpush.bf16.msra.mxu0 0
        %1187 = vmatpush.bf16.msra.mxu0 0
        %1188 = vmatpush.bf16.msra.mxu0 0
        %1189 = vmatpush.bf16.msra.mxu0 %v1180
        %1190 = vmatmul.bf16.gmra.mxu0 %v1177
        %v1191 = vpop.f32.mrf.mxu0
        %v1192 = vadd.f32 0.0, %v1191
        %v1193 = vpop.f32.mrf.mxu0
        %1194 = vdwg.mxu0
        %1196 = vrot.lane.b32.xlu0 %v1192, 8
        %v1197 = vpop.permute.xlu0 %1196
        %1199 = vst.msk [vmem:[#allocation2 + $0x8] sm:$0xff] %vm902, %v1197
        %1200 = vrot.lane.b32.xlu0 %v1054, 112
        %v1201 = vpop.permute.xlu0 %1200
        %1202 = vrot.lane.b32.xlu0 %v1055, 80
        %v1203 = vpop.permute.xlu0 %1202
        %v1205 = vsel %vm760, %v1201, 0
        %v1208 = vsel %vm760, %v1203, 0
        %1210 = vmatpush.bf16.xpose.msra.mxu0 0
        %1211 = vmatpush.bf16.xpose.msra.mxu0 0
        %1212 = vmatpush.bf16.xpose.msra.mxu0 0
        %1213 = vmatpush.bf16.xpose.msra.mxu0 0
        %1214 = vmatpush.bf16.xpose.msra.mxu0 0
        %1215 = vmatpush.bf16.xpose.msra.mxu0 0
        %1216 = vmatpush.bf16.xpose.msra.mxu0 0
        %1217 = vmatpush.bf16.xpose.msra.mxu0 %v1208
        %1218 = vmatmul.bf16.gmra.mxu0 %v1205
        %v1219 = vpop.f32.mrf.mxu0
        %v1220 = vadd.f32 0.0, %v1219
        %v1221 = vpop.f32.mrf.mxu0
        %1222 = vdwg.mxu0
        %v1223 = vsel %vm760, %v1220, -inf
        %1224 = vmax.xlane.f32.xlu0 %v1223
        %v1225 = vpop.xlane.xlu0 %1224
        %v1226 = vsub.f32 %v1220, %v1225
        %v1227 = vmul.f32 %v1226, 1.442695
        %v1228 = vpow.pop %v1227
        %v1229 = vsel %vm760, %v1228, 0.0
        %1230 = vadd.xlane.f32.xlu0 %v1229
        %v1231 = vpop.xlane.xlu0 %1230
        %v1232 = vrcp.pop %v1231
        %v1233 = vmul.f32 %v1231, %v1232
        %v1234 = vsub.f32 1.0, %v1233
        %v1235 = vmul.f32 %v1232, %v1234
        %v1236 = vadd.f32 %v1232, %v1235
        %vm1237 = vweird.f32 %v1231
        %vm1238 = vweird.f32 %v1232
        %vm1239 = vmor %vm1237, %vm1238
        %v1240 = vsel %vm1239, %v1232, %v1236
        %v1241 = vand.u32 2147483647, %v1231
        %vm1242 = vcmp.eq.f32.partialorder %v1241, 8.507059e+37
        %v1243 = vand.u32 %v1231, 2147483648
        %v1244 = vor.u32 1.1754944e-38, %v1243
        %v1245 = vsel %vm1242, %v1244, %v1240
        %v1246 = vmul.f32 %v1228, %v1245
        %v1247 = vpack.c.bf16 %v1246, %v1246
        %1248 = vrot.lane.b32.xlu0 %v1055, 48
        %v1249 = vpop.permute.xlu0 %1248
        %v1251 = vsel %vm760, %v1247, 0
        %v1254 = vsel %vm810, %v1249, 0
        %1256 = vmatpush.bf16.msra.mxu0 0
        %1257 = vmatpush.bf16.msra.mxu0 0
        %1258 = vmatpush.bf16.msra.mxu0 0
        %1259 = vmatpush.bf16.msra.mxu0 0
        %1260 = vmatpush.bf16.msra.mxu0 0
        %1261 = vmatpush.bf16.msra.mxu0 0
        %1262 = vmatpush.bf16.msra.mxu0 0
        %1263 = vmatpush.bf16.msra.mxu0 %v1254
        %1264 = vmatmul.bf16.gmra.mxu0 %v1251
        %v1265 = vpop.f32.mrf.mxu0
        %v1266 = vadd.f32 0.0, %v1265
        %v1267 = vpop.f32.mrf.mxu0
        %1268 = vdwg.mxu0
        %1270 = vrot.lane.b32.xlu0 %v1266, 16
        %v1271 = vpop.permute.xlu0 %1270
        %1273 = vst.msk [vmem:[#allocation2 + $0x8] sm:$0xff] %vm977, %v1271
        %1274 = vrot.lane.b32.xlu0 %v1054, 104
        %v1275 = vpop.permute.xlu0 %1274
        %1276 = vrot.lane.b32.xlu0 %v1055, 72
        %v1277 = vpop.permute.xlu0 %1276
        %v1279 = vsel %vm760, %v1275, 0
        %v1282 = vsel %vm760, %v1277, 0
        %1284 = vmatpush.bf16.xpose.msra.mxu0 0
        %1285 = vmatpush.bf16.xpose.msra.mxu0 0
        %1286 = vmatpush.bf16.xpose.msra.mxu0 0
        %1287 = vmatpush.bf16.xpose.msra.mxu0 0
        %1288 = vmatpush.bf16.xpose.msra.mxu0 0
        %1289 = vmatpush.bf16.xpose.msra.mxu0 0
        %1290 = vmatpush.bf16.xpose.msra.mxu0 0
        %1291 = vmatpush.bf16.xpose.msra.mxu0 %v1282
        %1292 = vmatmul.bf16.gmra.mxu0 %v1279
        %v1293 = vpop.f32.mrf.mxu0
        %v1294 = vadd.f32 0.0, %v1293
        %v1295 = vpop.f32.mrf.mxu0
        %1296 = vdwg.mxu0
        %v1297 = vsel %vm760, %v1294, -inf
        %1298 = vmax.xlane.f32.xlu0 %v1297
        %v1299 = vpop.xlane.xlu0 %1298
        %v1300 = vsub.f32 %v1294, %v1299
        %v1301 = vmul.f32 %v1300, 1.442695
        %v1302 = vpow.pop %v1301
        %v1303 = vsel %vm760, %v1302, 0.0
        %1304 = vadd.xlane.f32.xlu0 %v1303
        %v1305 = vpop.xlane.xlu0 %1304
        %v1306 = vrcp.pop %v1305
        %v1307 = vmul.f32 %v1305, %v1306
        %v1308 = vsub.f32 1.0, %v1307
        %v1309 = vmul.f32 %v1306, %v1308
        %v1310 = vadd.f32 %v1306, %v1309
        %vm1311 = vweird.f32 %v1305
        %vm1312 = vweird.f32 %v1306
        %vm1313 = vmor %vm1311, %vm1312
        %v1314 = vsel %vm1313, %v1306, %v1310
        %v1315 = vand.u32 2147483647, %v1305
        %vm1316 = vcmp.eq.f32.partialorder %v1315, 8.507059e+37
        %v1317 = vand.u32 %v1305, 2147483648
        %v1318 = vor.u32 1.1754944e-38, %v1317
        %v1319 = vsel %vm1316, %v1318, %v1314
        %v1320 = vmul.f32 %v1302, %v1319
        %v1321 = vpack.c.bf16 %v1320, %v1320
        %1322 = vrot.lane.b32.xlu0 %v1055, 40
        %v1323 = vpop.permute.xlu0 %1322
        %v1325 = vsel %vm760, %v1321, 0
        %v1328 = vsel %vm810, %v1323, 0
        %1330 = vmatpush.bf16.msra.mxu0 0
        %1331 = vmatpush.bf16.msra.mxu0 0
        %1332 = vmatpush.bf16.msra.mxu0 0
        %1333 = vmatpush.bf16.msra.mxu0 0
        %1334 = vmatpush.bf16.msra.mxu0 0
        %1335 = vmatpush.bf16.msra.mxu0 0
        %1336 = vmatpush.bf16.msra.mxu0 0
        %1337 = vmatpush.bf16.msra.mxu0 %v1328
        %1338 = vmatmul.bf16.gmra.mxu0 %v1325
        %v1339 = vpop.f32.mrf.mxu0
        %v1340 = vadd.f32 0.0, %v1339
        %v1341 = vpop.f32.mrf.mxu0
        %1342 = vdwg.mxu0
        %1344 = vrot.lane.b32.xlu0 %v1340, 24
        %v1345 = vpop.permute.xlu0 %1344
        %1347 = vst.msk [vmem:[#allocation2 + $0x8] sm:$0xff] %vm1052, %v1345
        %v1348 = vld [vmem:[#allocation2] sm:$0xff]
        %v1349 = vld [vmem:[#allocation2 + $0x8] sm:$0xff]
        %v1350 = vpack.c.bf16 %v1349, %v1348
        %v1351 = vld [vmem:[%s612] sm:$0xf]
        %v1352 = vld [vmem:[%s612 + $0x4] sm:$0xf]
        %v1353 = vld [vmem:[%s612 + $0x8] sm:$0xf]
        %v1354 = vld [vmem:[%s612 + $0xc] sm:$0xf]
        %v1355 = vld [vmem:[%s615] sm:$0x1]
        %v1357 = vperm.slane %v1355, 0
        %v1363 = vunpack.c.l.b16 %v1351
        %v1364 = vunpack.c.l.b16 %v1352
        %v1365 = vunpack.c.l.b16 %v1353
        %v1366 = vunpack.c.l.b16 %v1354
        %v1367 = vpack.c.b16 %v1364, %v1363
        %v1368 = vpack.c.b16 %v1366, %v1365
        %v1372 = vsel %vm651, %v1350, 0
        %1374 = vmatpush.bf16.msra.mxu0 0
        %1375 = vmatpush.bf16.msra.mxu0 0
        %1376 = vmatpush.bf16.msra.mxu0 0
        %1377 = vmatpush.bf16.msra.mxu0 0
        %1378 = vmatpush.bf16.msra.mxu0 0
        %1379 = vmatpush.bf16.msra.mxu0 0
        %1380 = vmatpush.bf16.msra.mxu0 %v1368
        %1381 = vmatpush.bf16.msra.mxu0 %v1367
        %1382 = vmatmul.bf16.gmra.mxu0 %v1372
        %v1383 = vpop.f32.mrf.mxu0
        %v1384 = vadd.f32 %v1357, %v1383
        %v1385 = vpop.f32.mrf.mxu0
        %v1386 = vadd.f32 %v1357, %v1385
        %1387 = vdwg.mxu0
        %v1388 = vadd.f32 %v649, %v1384
        %v1389 = vadd.f32 %v650, %v1386
        %v1390 = vsel %vm651, %v1388, 0.0
        %1391 = vadd.xlane.f32.xlu0 %v1390
        %v1392 = vpop.xlane.xlu0 %1391
        %v1393 = vsel %vm651, %v1389, 0.0
        %1394 = vadd.xlane.f32.xlu0 %v1393
        %v1395 = vpop.xlane.xlu0 %1394
        %v1396 = vmul.f32 %v1392, %v664
        %v1397 = vmul.f32 %v1395, %v664
        %v1398 = vsub.f32 %v1388, %v1396
        %v1399 = vsub.f32 %v1389, %v1397
        %v1400 = vmul.f32 %v1398, %v1398
        %v1401 = vmul.f32 %v1399, %v1399
        %v1402 = vsel %vm651, %v1400, 0.0
        %1403 = vadd.xlane.f32.xlu0 %v1402
        %v1404 = vpop.xlane.xlu0 %1403
        %v1405 = vsel %vm651, %v1401, 0.0
        %1406 = vadd.xlane.f32.xlu0 %v1405
        %v1407 = vpop.xlane.xlu0 %1406
        %v1408 = vmul.f32 %v1404, %v664
        %v1409 = vmul.f32 %v1407, %v664
        %v1410 = vadd.f32 %v1408, 1e-05
        %v1411 = vadd.f32 %v1409, 1e-05
        %v1412 = vrsqrt.pop %v1410
        %v1413 = vmul.f32 %v1412, %v1410
        %v1414 = vmul.f32 %v1413, %v1412
        %v1415 = vmul.f32 0.5, %v1414
        %v1416 = vsub.f32 1.5, %v1415
        %v1417 = vmul.f32 %v1412, %v1416
        %vm1418 = vweird.f32 %v1410
        %vm1419 = vweird.f32 %v1412
        %vm1420 = vmor %vm1418, %vm1419
        %v1421 = vsel %vm1420, %v1412, %v1417
        %v1422 = vrsqrt.pop %v1411
        %v1423 = vmul.f32 %v1422, %v1411
        %v1424 = vmul.f32 %v1423, %v1422
        %v1425 = vmul.f32 0.5, %v1424
        %v1426 = vsub.f32 1.5, %v1425
        %v1427 = vmul.f32 %v1422, %v1426
        %vm1428 = vweird.f32 %v1411
        %vm1429 = vweird.f32 %v1422
        %vm1430 = vmor %vm1428, %vm1429
        %v1431 = vsel %vm1430, %v1422, %v1427
        %v1432 = vmul.f32 %v1398, %v1421
        %v1433 = vmul.f32 %v1399, %v1431
        %v1434 = vld [vmem:[%s618] sm:$0x1]
        %v1436 = vperm.slane %v1434, 0
        %v1438 = vmul.f32 %v1432, %v1436
        %v1439 = vmul.f32 %v1433, %v1436
        %v1440 = vld [vmem:[%s621] sm:$0x1]
        %v1442 = vperm.slane %v1440, 0
        %v1444 = vadd.f32 %v1438, %v1442
        %v1445 = vadd.f32 %v1439, %v1442
        %v1446 = vpack.c.bf16 %v1445, %v1444
        %v1447 = vld [vmem:[%s626] sm:$0xf]
        %v1448 = vld [vmem:[%s626 + $0x4] sm:$0xf]
        %v1449 = vld [vmem:[%s626 + $0x8] sm:$0xf]
        %v1450 = vld [vmem:[%s626 + $0xc] sm:$0xf]
        %v1451 = vld [vmem:[%s629] sm:$0x1]
        %v1453 = vperm.slane %v1451, 0
        %v1459 = vunpack.c.l.b16 %v1447
        %v1460 = vunpack.c.l.b16 %v1448
        %v1461 = vunpack.c.l.b16 %v1449
        %v1462 = vunpack.c.l.b16 %v1450
        %v1463 = vpack.c.b16 %v1460, %v1459
        %v1464 = vpack.c.b16 %v1462, %v1461
        %v1468 = vsel %vm651, %v1446, 0
        %1470 = vmatpush.bf16.msra.mxu0 0
        %1471 = vmatpush.bf16.msra.mxu0 0
        %1472 = vmatpush.bf16.msra.mxu0 0
        %1473 = vmatpush.bf16.msra.mxu0 0
        %1474 = vmatpush.bf16.msra.mxu0 0
        %1475 = vmatpush.bf16.msra.mxu0 0
        %1476 = vmatpush.bf16.msra.mxu0 %v1464
        %1477 = vmatpush.bf16.msra.mxu0 %v1463
        %1478 = vmatmul.bf16.gmra.mxu0 %v1468
        %v1479 = vpop.f32.mrf.mxu0
        %v1480 = vadd.f32 %v1453, %v1479
        %v1481 = vpop.f32.mrf.mxu0
        %v1482 = vadd.f32 %v1453, %v1481
        %1483 = vdwg.mxu0
        %v1484 = vmul.f32 %v1480, 1.702
        %v1485 = vmul.f32 %v1482, 1.702
        %v1486 = vxor.u32 %v1484, 2147483648
        %v1487 = vxor.u32 %v1485, 2147483648
        %v1488 = vmul.f32 %v1486, 1.442695
        %v1489 = vpow.pop %v1488
        %v1490 = vmul.f32 %v1487, 1.442695
        %v1491 = vpow.pop %v1490
        %v1492 = vadd.f32 %v1489, 1.0
        %v1493 = vadd.f32 %v1491, 1.0
        %v1494 = vrcp.pop %v1492
        %v1495 = vmul.f32 %v1492, %v1494
        %v1496 = vsub.f32 1.0, %v1495
        %v1497 = vmul.f32 %v1494, %v1496
        %v1498 = vadd.f32 %v1494, %v1497
        %vm1499 = vweird.f32 %v1492
        %vm1500 = vweird.f32 %v1494
        %vm1501 = vmor %vm1499, %vm1500
        %v1502 = vsel %vm1501, %v1494, %v1498
        %v1503 = vand.u32 2147483647, %v1492
        %vm1504 = vcmp.eq.f32.partialorder %v1503, 8.507059e+37
        %v1505 = vand.u32 %v1492, 2147483648
        %v1506 = vor.u32 1.1754944e-38, %v1505
        %v1507 = vsel %vm1504, %v1506, %v1502
        %v1508 = vmul.f32 1.0, %v1507
        %v1509 = vrcp.pop %v1493
        %v1510 = vmul.f32 %v1493, %v1509
        %v1511 = vsub.f32 1.0, %v1510
        %v1512 = vmul.f32 %v1509, %v1511
        %v1513 = vadd.f32 %v1509, %v1512
        %vm1514 = vweird.f32 %v1493
        %vm1515 = vweird.f32 %v1509
        %vm1516 = vmor %vm1514, %vm1515
        %v1517 = vsel %vm1516, %v1509, %v1513
        %v1518 = vand.u32 2147483647, %v1493
        %vm1519 = vcmp.eq.f32.partialorder %v1518, 8.507059e+37
        %v1520 = vand.u32 %v1493, 2147483648
        %v1521 = vor.u32 1.1754944e-38, %v1520
        %v1522 = vsel %vm1519, %v1521, %v1517
        %v1523 = vmul.f32 1.0, %v1522
        %v1524 = vmul.f32 %v1480, %v1508
        %v1525 = vmul.f32 %v1482, %v1523
        %v1526 = vpack.c.bf16 %v1525, %v1524
        %v1527 = vld [vmem:[%s634] sm:$0xf]
        %v1528 = vld [vmem:[%s634 + $0x4] sm:$0xf]
        %v1529 = vld [vmem:[%s634 + $0x8] sm:$0xf]
        %v1530 = vld [vmem:[%s634 + $0xc] sm:$0xf]
        %v1531 = vld [vmem:[%s634 + $0x10] sm:$0xf]
        %v1532 = vld [vmem:[%s634 + $0x14] sm:$0xf]
        %v1533 = vld [vmem:[%s634 + $0x18] sm:$0xf]
        %v1534 = vld [vmem:[%s634 + $0x1c] sm:$0xf]
        %v1535 = vld [vmem:[%s634 + $0x20] sm:$0xf]
        %v1536 = vld [vmem:[%s634 + $0x24] sm:$0xf]
        %v1537 = vld [vmem:[%s634 + $0x28] sm:$0xf]
        %v1538 = vld [vmem:[%s634 + $0x2c] sm:$0xf]
        %v1539 = vld [vmem:[%s634 + $0x30] sm:$0xf]
        %v1540 = vld [vmem:[%s634 + $0x34] sm:$0xf]
        %v1541 = vld [vmem:[%s634 + $0x38] sm:$0xf]
        %v1542 = vld [vmem:[%s634 + $0x3c] sm:$0xf]
        %v1543 = vld [vmem:[%s637] sm:$0x1]
        %v1545 = vperm.slane %v1543, 0
        %v1563 = vunpack.c.l.b16 %v1527
        %v1564 = vunpack.c.l.b16 %v1528
        %v1565 = vunpack.c.l.b16 %v1529
        %v1566 = vunpack.c.l.b16 %v1530
        %v1567 = vunpack.c.l.b16 %v1531
        %v1568 = vunpack.c.l.b16 %v1532
        %v1569 = vunpack.c.l.b16 %v1533
        %v1570 = vunpack.c.l.b16 %v1534
        %v1571 = vunpack.c.l.b16 %v1535
        %v1572 = vunpack.c.l.b16 %v1536
        %v1573 = vunpack.c.l.b16 %v1537
        %v1574 = vunpack.c.l.b16 %v1538
        %v1575 = vunpack.c.l.b16 %v1539
        %v1576 = vunpack.c.l.b16 %v1540
        %v1577 = vunpack.c.l.b16 %v1541
        %v1578 = vunpack.c.l.b16 %v1542
        %v1579 = vpack.c.b16 %v1564, %v1563
        %v1580 = vpack.c.b16 %v1566, %v1565
        %v1581 = vpack.c.b16 %v1568, %v1567
        %v1582 = vpack.c.b16 %v1570, %v1569
        %v1583 = vpack.c.b16 %v1572, %v1571
        %v1584 = vpack.c.b16 %v1574, %v1573
        %v1585 = vpack.c.b16 %v1576, %v1575
        %v1586 = vpack.c.b16 %v1578, %v1577
        %1595 = vmatpush.bf16.msra.mxu0 %v1586
        %1596 = vmatpush.bf16.msra.mxu0 %v1585
        %1597 = vmatpush.bf16.msra.mxu0 %v1584
        %1598 = vmatpush.bf16.msra.mxu0 %v1583
        %1599 = vmatpush.bf16.msra.mxu0 %v1582
        %1600 = vmatpush.bf16.msra.mxu0 %v1581
        %1601 = vmatpush.bf16.msra.mxu0 %v1580
        %1602 = vmatpush.bf16.msra.mxu0 %v1579
        %1603 = vmatmul.bf16.gmra.mxu0 %v1526
        %v1604 = vpop.f32.mrf.mxu0
        %v1605 = vadd.f32 %v1545, %v1604
        %v1606 = vpop.f32.mrf.mxu0
        %v1607 = vadd.f32 %v1545, %v1606
        %1608 = vdwg.mxu0
        %v1609 = vadd.f32 %v1388, %v1605
        %v1610 = vadd.f32 %v1389, %v1607
        %1611 = vst.msk [vmem:[#allocation3] sm:$0xff] %vm651, %v1609
        %1612 = vst.msk [vmem:[#allocation3 + $0x8] sm:$0xff] %vm651, %v1610
        // Predicated region
        $region77: #{tpu_custom_call.1} parent=71 // pred_check
          %p1613 = pneg %p393
        $region78: #{tpu_custom_call.1} parent=71 // pred_check_branch
          %1615 = sbr.rel (%p1613) target = $region80
        $region79: #{tpu_custom_call.1} parent=71 // pred_region
          %s1616 = smul.u32 2, %s29
          %1618 = vsyncadd [#allocation4], 0
          %s1619 = smul.addr %s1616, 8
          %s1620 = scalar_lea.hbm %s13, %s1619
          %s1621 = sshll.u32 [#allocation3], 4
          %s1622 = int_to_ptr.vmem [resolvable:$true] %s1621
          %s1623 = sshll.u32 %s1620, 4
          %s1624 = int_to_ptr.hbm [resolvable:$true] %s1623
          %1629 = dma.vmem_to_hbm [thread:$0]  %s1622, 256, %s1624, [#allocation4], 128, 128, 8
        $region80: #{tpu_custom_call.1} parent=71 // pred_fallthru
          _
        // Predicated region
        $region81: #{tpu_custom_call.1} parent=71 // pred_check
          %p1630 = pneg %p393
        $region82: #{tpu_custom_call.1} parent=71 // pred_check_branch
          %1632 = sbr.rel (%p1630) target = $region84
        $region83: #{tpu_custom_call.1} parent=71 // pred_region
          %1634 = dma.done [#allocation4], 256
        $region84: #{tpu_custom_call.1} parent=71 // pred_fallthru
          _
      $region72: #{tpu_custom_call.1} parent=5 // pred_fallthru
        _
      %p1635 = scmp.le.s32.totalorder 2, %s20
      // Predicated region
      $region85: #{tpu_custom_call.1} parent=5 // pred_check
        %p1636 = pneg %p1635
      $region86: #{tpu_custom_call.1} parent=5 // pred_check_branch
        %1638 = sbr.rel (%p1636) target = $region88
      $region87: #{tpu_custom_call.1} parent=5 // pred_region
        %s1639 = ssub.s32 %s20, 2
      $region88: #{tpu_custom_call.1} parent=5 // pred_fallthru
        _
    $region6: #{tpu_custom_call.1} parent=1 // loop_footer
      %s24 = sadd.s32 1, %s20
    $region7: #{tpu_custom_call.1} parent=1 // loop_footer_branch
      %19 = sbr.rel target = $region3
    $region8: #{tpu_custom_call.1} parent=1 // loop_exit
      _
    %1640 = vsyncpa [#allocation4], 1
    %s1641 = scalar_lea.sflag [#allocation4], 1
    %1642 = vsyncpa %s1641, 1

</llo_original>
